<compile_context>
chip_gen: v5e
topology: v5e:2x2
jax: 0.10.0
libtpu: 0.0.40
codegen_flags: <defaults>
</compile_context>

<pallas_src>
import functools

import jax
import jax.numpy as jnp
from jax import lax
from jax.experimental import pallas as pl
from jax.experimental.pallas import tpu as pltpu


# ----------------------------------------------------------------------------
# Single fused kernel for the whole forward pass:
#   per layer: relationalGraphStack -> Rewirescorelayer -> GraphRewiring
#              -> RewireGearnet, with the rewired graph kept resident in VMEM.
# ----------------------------------------------------------------------------
def _fused_forward_kernel(at_ref, x_ref, gsel_ref, *rest,
                          num_node, num_relation, attn_num_relation,
                          num_layers, rel_dims, diff_dims, topk, scale):
    N = num_node
    R = num_relation
    AR = attn_num_relation
    SI = R - AR
    f32 = jnp.float32
    bf16 = jnp.bfloat16

    w_refs = rest[:5 * num_layers]
    out_ref = rest[5 * num_layers]
    curat_ref = rest[5 * num_layers + 1]    # (R*N, N) bf16 scratch: current graph
    slin_ref = rest[5 * num_layers + 2]     # (N, max_din_r) f32 scratch: score input

    orig_at = at_ref[...]                               # (R*N, N) bf16, original graph
    curat_ref[...] = orig_at                            # layer 0 runs on the original
    slin_ref[:, :rel_dims[0][0]] = x_ref[...]           # score_layer_input_0 = x

    hid = None
    for i in range(num_layers):                         # static unroll over layers
        rel_w_ref, rel_b_ref, mt_ref, g_w_ref, g_b_ref = w_refs[5 * i:5 * (i + 1)]
        din_r, dout_r = rel_dims[i]
        din_g, dout_g = diff_dims[i]

        slin_b = slin_ref[:, :din_r].astype(bf16)       # (N, din_r)
        cur_at = curat_ref[...]                         # (R*N, N) bf16, current graph

        # ---- relationalGraphStack: all relations' message passing, ONE matmul
        msg = jnp.dot(cur_at, slin_b, preferred_element_type=f32)      # (R*N, din_r)
        rel_outs = []
        for r in range(R):                              # static unroll; R is tiny
            h = jnp.dot(msg[r * N:(r + 1) * N, :].astype(bf16), rel_w_ref[r],
                        preferred_element_type=f32) + rel_b_ref[r]
            # BatchNorm, one-pass batch statistics (gamma=1, beta=0, eps=1e-5).
            # TODO(synk): batch stats only; no trained affine / running stats.
            mu = jnp.mean(h, axis=0, keepdims=True)
            ex2 = jnp.mean(h * h, axis=0, keepdims=True)
            h = (h - mu) * lax.rsqrt(ex2 - mu * mu + 1e-5)
            rel_outs.append(jnp.maximum(h, 0.0))        # (N, dout_r) f32

        # ---- Rewirescorelayer + GraphRewiring: rewrite the attention blocks ----
        nt_dims = (((1,), (1,)), ((), ()))              # A @ B^T
        for a in range(AR):
            h_a = rel_outs[SI + a].astype(bf16)         # (N, dout_r)
            # Pre-folded M = Wk @ Wq^T:  s_t[node_out, node_in] = (h_out M) . h_in
            p = jnp.dot(h_a, mt_ref[...], preferred_element_type=f32)
            s_t = lax.dot_general(p.astype(bf16), h_a, nt_dims,
                                  preferred_element_type=f32) * scale
            s_t = jax.nn.sigmoid(s_t)                   # (N, N) f32
            # Deterministic top-k per node_in: k rounds of column-max + mask.
            # TODO(synk): Gumbel top-k sampling (temperature=0.5) and window_size
            # masking from the reference are replaced by deterministic top-k
            # (ties at the threshold are kept).
            work = s_t
            thr = None
            for _ in range(topk):                       # k iterations, O(k*N) work
                thr = jnp.max(work, axis=0, keepdims=True)        # (1, N)
                work = jnp.where(work >= thr, -1.0, work)
            s_t = jnp.where(s_t >= thr, s_t, 0.0)
            orig_blk = orig_at[(SI + a) * N:(SI + a + 1) * N, :].astype(f32)
            # max with the ORIGINAL attention relation; store the block in place.
            curat_ref[(SI + a) * N:(SI + a + 1) * N, :] = (
                jnp.maximum(orig_blk, s_t).astype(bf16))
        # TODO(synk): the reference permutes relation order after rewiring (attn
        # relations first, space relations last); original ordering is kept here.

        # ---- RewireGearnet on the rewired graph --------------------------------
        lin_b = slin_b[:, :din_g]                       # layer_input (prev hidden / x)
        new_at = curat_ref[...]                         # rewired graph, bf16
        mg = jnp.dot(new_at, lin_b, preferred_element_type=f32)        # (R*N, din_g)
        acc = jnp.dot(mg[0:N, :].astype(bf16), g_w_ref[0],
                      preferred_element_type=f32)
        for r in range(1, R):                           # chained f32 accumulation
            acc = acc + jnp.dot(mg[r * N:(r + 1) * N, :].astype(bf16), g_w_ref[r],
                                preferred_element_type=f32)
        hid = jnp.maximum(acc + g_b_ref[...], 0.0)      # (N, dout_g) f32

        # ---- next layer's score_layer_input, assembled lane-dense in VMEM ------
        if i + 1 < num_layers:
            slin_ref[:, :dout_g] = hid
            # relational_output.view(N, R*d) is a raw row-major reinterpretation
            # of the (R, N, d) stack; realized via constant row-gather matmuls.
            s_stack = jnp.concatenate(rel_outs, axis=0).astype(bf16)   # (R*N, dout_r)
            for q in range(R):
                v_q = jnp.dot(gsel_ref[q], s_stack, preferred_element_type=f32)
                slin_ref[:, dout_g + q * dout_r: dout_g + (q + 1) * dout_r] = v_q

    out_ref[...] = hid


# ----------------------------------------------------------------------------
# Glue: adjacency construction (AT form), parameters, full forward
# ----------------------------------------------------------------------------
def build_at2d(edge_list, edge_weight, num_node, num_relation):
    # AT2d[rel*N + node_out, node_in] = weight  (transpose of the reference's
    # dense adjacency[node_in, rel*N + node_out]).
    node_in = edge_list[:, 0]
    node_out = edge_list[:, 1]
    rel = edge_list[:, 2]
    at = jnp.zeros((num_relation * num_node, num_node), jnp.float32)
    return at.at[rel * num_node + node_out, node_in].add(edge_weight)


def init_params(key, cfg):
    R = cfg["num_relation"]
    params = {}
    keys = jax.random.split(key, 4 * cfg["num_layers"])
    ki = iter(keys)
    for i in range(cfg["num_layers"]):
        din_r, dout_r = cfg["relation_dims"][i]
        params[f"rel_W_{i}"] = (jax.random.normal(next(ki), (R, din_r, dout_r),
                                                  jnp.float32) / jnp.sqrt(din_r))
        params[f"rel_b_{i}"] = jnp.zeros((R, dout_r), jnp.float32)
        d_attn = dout_r
        params[f"wq_{i}"] = (jax.random.normal(next(ki), (d_attn, cfg["score_out_dim"]),
                                               jnp.float32) / jnp.sqrt(d_attn))
        params[f"wk_{i}"] = (jax.random.normal(next(ki), (d_attn, cfg["score_out_dim"]),
                                               jnp.float32) / jnp.sqrt(d_attn))
        din_g, dout_g = cfg["diffusion_dims"][i]
        params[f"g_W_{i}"] = (jax.random.normal(next(ki), (R, din_g, dout_g),
                                                jnp.float32) / jnp.sqrt(din_g))
        params[f"g_b_{i}"] = jnp.zeros((dout_g,), jnp.float32)
    return params


def dgm_gearnet_edge_forward(params, at2d, x, cfg):
    N, din0 = x.shape
    R = cfg["num_relation"]
    L = cfg["num_layers"]
    rel_dims = tuple(tuple(d) for d in cfg["relation_dims"])
    diff_dims = tuple(tuple(d) for d in cfg["diffusion_dims"])
    assert din0 == rel_dims[0][0]
    for i in range(L - 1):
        # score_layer_input_{i+1} = [hidden_i | rel_stack_i.view(N, R*d)]
        assert rel_dims[i + 1][0] == diff_dims[i][1] + R * rel_dims[i][1]
        assert diff_dims[i + 1][0] == diff_dims[i][1]
    head_dim = cfg["score_out_dim"] // cfg["num_heads"]
    scale = 1.0 / (cfg["num_heads"] * (head_dim ** 0.5))
    bf16 = jnp.bfloat16

    # Constant row-gather matrices realizing relational_output.view(N, R*d):
    # V_q[n, :] = stack[n*R + q, :]   with stack = (R*N, d) relational output.
    rows = jnp.arange(N)[None, :, None] * R + jnp.arange(R)[:, None, None]   # (R,N,1)
    g_sel = (rows == jnp.arange(R * N)[None, None, :]).astype(bf16)          # (R,N,R*N)

    args = [at2d.astype(bf16), x, g_sel]
    for i in range(L):
        _, dr_out = rel_dims[i]
        _, dg_out = diff_dims[i]
        mt = jnp.dot(params[f"wk_{i}"], params[f"wq_{i}"].T)   # pre-folded Wk @ Wq^T
        args += [params[f"rel_W_{i}"].astype(bf16),
                 params[f"rel_b_{i}"].reshape(R, 1, dr_out),
                 mt.astype(bf16),
                 params[f"g_W_{i}"].astype(bf16),
                 params[f"g_b_{i}"].reshape(1, dg_out)]

    max_din_r = max(d[0] for d in rel_dims)
    kernel = functools.partial(
        _fused_forward_kernel,
        num_node=N, num_relation=R, attn_num_relation=cfg["attn_num_relation"],
        num_layers=L, rel_dims=rel_dims, diff_dims=diff_dims,
        topk=cfg["k"], scale=scale)

    node_feature = pl.pallas_call(
        kernel,
        out_shape=jax.ShapeDtypeStruct((N, diff_dims[-1][-1]), jnp.float32),
        scratch_shapes=[
            pltpu.VMEM((R * N, N), bf16),               # resident rewired adjacency
            pltpu.VMEM((N, max_din_r), jnp.float32),    # lane-dense score_layer_input
        ],
    )(*args)

    graph_feature = jnp.sum(node_feature, axis=0, keepdims=True)   # SumReadout (1 graph)
    return {"graph_feature": graph_feature, "node_feature": node_feature}


if __name__ == "__main__":
    cfg = dict(
        num_relation=3,
        attn_num_relation=2,
        num_heads=2,
        window_size=4,                 # TODO(synk): window masking not replicated
        k=4,
        score_in_dim=32,
        score_out_dim=16,
        num_layers=2,
        relation_dims=[[32, 32], [32 + 3 * 32, 32]],
        diffusion_dims=[[32, 32], [32, 32]],
    )
    N, D_in, E = 16, 32, 48
    key = jax.random.PRNGKey(0)
    k_feat, k_ei, k_eo, k_er, k_par = jax.random.split(key, 5)
    x = jax.random.normal(k_feat, (N, D_in), jnp.float32)
    node_in = jax.random.randint(k_ei, (E,), 0, N)
    node_out = jax.random.randint(k_eo, (E,), 0, N)
    rel = jax.random.randint(k_er, (E,), 0, cfg["num_relation"])
    edge_list = jnp.stack([node_in, node_out, rel], axis=1)
    edge_weight = jnp.ones((E,), jnp.float32)

    at2d = build_at2d(edge_list, edge_weight, N, cfg["num_relation"])
    params = init_params(k_par, cfg)

    fwd = jax.jit(functools.partial(dgm_gearnet_edge_forward, cfg=cfg))
    out = fwd(params, at2d, x)
    jax.block_until_ready(out["node_feature"])
    jax.block_until_ready(out["graph_feature"])

    assert out["node_feature"].shape == (N, cfg["diffusion_dims"][-1][-1])
    assert out["graph_feature"].shape == (1, cfg["diffusion_dims"][-1][-1])
    assert bool(jnp.all(jnp.isfinite(out["node_feature"])))
    assert bool(jnp.all(jnp.isfinite(out["graph_feature"])))
    print("KERNEL_OK")
</pallas_src>

<mosaic_0001>
module attributes {stable_mosaic.version = 11 : i64} {
  func.func @_fused_forward_kernel(%arg0: memref<48x16xbf16, #tpu.memory_space<vmem>>, %arg1: memref<16x32xf32, #tpu.memory_space<vmem>>, %arg2: memref<3x16x48xbf16, #tpu.memory_space<vmem>>, %arg3: memref<3x32x32xbf16, #tpu.memory_space<vmem>>, %arg4: memref<3x1x32xf32, #tpu.memory_space<vmem>>, %arg5: memref<32x32xbf16, #tpu.memory_space<vmem>>, %arg6: memref<3x32x32xbf16, #tpu.memory_space<vmem>>, %arg7: memref<1x32xf32, #tpu.memory_space<vmem>>, %arg8: memref<3x128x32xbf16, #tpu.memory_space<vmem>>, %arg9: memref<3x1x32xf32, #tpu.memory_space<vmem>>, %arg10: memref<32x32xbf16, #tpu.memory_space<vmem>>, %arg11: memref<3x32x32xbf16, #tpu.memory_space<vmem>>, %arg12: memref<1x32xf32, #tpu.memory_space<vmem>>, %arg13: memref<16x32xf32, #tpu.memory_space<vmem>>, %arg14: memref<48x16xbf16, #tpu.memory_space<vmem>>, %arg15: memref<16x128xf32, #tpu.memory_space<vmem>>) attributes {dimension_semantics = [], scalar_prefetch = 0 : i64, scratch_operands = 2 : i64, tpu.core_type = #tpu.core_type<tc>} {
    %c0 = arith.constant 0 : index
    %c0_0 = arith.constant 0 : index
    %0 = vector.load %arg0[%c0, %c0_0] : memref<48x16xbf16, #tpu.memory_space<vmem>>, vector<48x16xbf16>
    %c0_1 = arith.constant 0 : index
    %c0_2 = arith.constant 0 : index
    %1 = vector.load %arg14[%c0_1, %c0_2] : memref<48x16xbf16, #tpu.memory_space<vmem>>, vector<48x16xbf16>
    tpu.vector_store %arg14[%c0_1, %c0_2], %0 {strides = array<i32>} : memref<48x16xbf16, #tpu.memory_space<vmem>>, vector<48x16xbf16>,
    %c0_3 = arith.constant 0 : index
    %c0_4 = arith.constant 0 : index
    %2 = vector.load %arg1[%c0_3, %c0_4] : memref<16x32xf32, #tpu.memory_space<vmem>>, vector<16x32xf32>
    %c0_5 = arith.constant 0 : index
    %c0_6 = arith.constant 0 : index
    %3 = vector.load %arg15[%c0_5, %c0_6] : memref<16x128xf32, #tpu.memory_space<vmem>>, vector<16x32xf32>
    tpu.vector_store %arg15[%c0_5, %c0_6], %2 {strides = array<i32>} : memref<16x128xf32, #tpu.memory_space<vmem>>, vector<16x32xf32>,
    %c0_7 = arith.constant 0 : index
    %c0_8 = arith.constant 0 : index
    %4 = vector.load %arg15[%c0_7, %c0_8] : memref<16x128xf32, #tpu.memory_space<vmem>>, vector<16x32xf32>
    %5 = arith.truncf %4 : vector<16x32xf32> to vector<16x32xbf16>
    %c0_9 = arith.constant 0 : index
    %c0_10 = arith.constant 0 : index
    %6 = vector.load %arg14[%c0_9, %c0_10] : memref<48x16xbf16, #tpu.memory_space<vmem>>, vector<48x16xbf16>
    %cst = arith.constant dense<0.000000e+00> : vector<48x32xf32>
    %7 = tpu.matmul %6, %5, %cst {dimension_numbers = #tpu.dot_dimension_numbers<[1], [0], [0], [1], [0, 0, 1, 1], [], []>} : vector<48x16xbf16>, vector<16x32xbf16>, vector<48x32xf32> -> vector<48x32xf32>
    %8 = vector.extract_strided_slice %7 {offsets = [0, 0], sizes = [16, 32], strides = [1, 1]} : vector<48x32xf32> to vector<16x32xf32>
    %9 = arith.truncf %8 : vector<16x32xf32> to vector<16x32xbf16>
    %c0_11 = arith.constant 0 : index
    %c0_12 = arith.constant 0 : index
    %c0_13 = arith.constant 0 : index
    %10 = vector.load %arg3[%c0_11, %c0_12, %c0_13] : memref<3x32x32xbf16, #tpu.memory_space<vmem>>, vector<1x32x32xbf16>
    %11 = vector.shape_cast %10 : vector<1x32x32xbf16> to vector<32x32xbf16>
    %cst_14 = arith.constant dense<0.000000e+00> : vector<16x32xf32>
    %12 = tpu.matmul %9, %11, %cst_14 {dimension_numbers = #tpu.dot_dimension_numbers<[1], [0], [0], [1], [0, 0, 1, 1], [], []>} : vector<16x32xbf16>, vector<32x32xbf16>, vector<16x32xf32> -> vector<16x32xf32>
    %c0_15 = arith.constant 0 : index
    %c0_16 = arith.constant 0 : index
    %c0_17 = arith.constant 0 : index
    %13 = vector.load %arg4[%c0_15, %c0_16, %c0_17] : memref<3x1x32xf32, #tpu.memory_space<vmem>>, vector<1x1x32xf32>
    %14 = vector.shape_cast %13 : vector<1x1x32xf32> to vector<1x32xf32>
    %15 = vector.broadcast %14 : vector<1x32xf32> to vector<16x32xf32>
    %16 = arith.addf %12, %15 : vector<16x32xf32>
    %cst_18 = arith.constant dense<0.000000e+00> : vector<32xf32>
    %17 = vector.multi_reduction <add>, %16, %cst_18 [0] : vector<16x32xf32> to vector<32xf32>
    %18 = vector.shape_cast %17 : vector<32xf32> to vector<1x32xf32>
    %cst_19 = arith.constant 1.600000e+01 : f32
    %19 = vector.broadcast %cst_19 : f32 to vector<1x32xf32>
    %20 = arith.divf %18, %19 : vector<1x32xf32>
    %21 = arith.mulf %16, %16 : vector<16x32xf32>
    %cst_20 = arith.constant dense<0.000000e+00> : vector<32xf32>
    %22 = vector.multi_reduction <add>, %21, %cst_20 [0] : vector<16x32xf32> to vector<32xf32>
    %23 = vector.shape_cast %22 : vector<32xf32> to vector<1x32xf32>
    %cst_21 = arith.constant 1.600000e+01 : f32
    %24 = vector.broadcast %cst_21 : f32 to vector<1x32xf32>
    %25 = arith.divf %23, %24 : vector<1x32xf32>
    %26 = vector.broadcast %20 : vector<1x32xf32> to vector<16x32xf32>
    %27 = arith.subf %16, %26 : vector<16x32xf32>
    %28 = arith.mulf %20, %20 : vector<1x32xf32>
    %29 = arith.subf %25, %28 : vector<1x32xf32>
    %cst_22 = arith.constant 9.99999974E-6 : f32
    %30 = vector.broadcast %cst_22 : f32 to vector<1x32xf32>
    %31 = arith.addf %29, %30 : vector<1x32xf32>
    %32 = math.rsqrt %31 : vector<1x32xf32>
    %33 = vector.broadcast %32 : vector<1x32xf32> to vector<16x32xf32>
    %34 = arith.mulf %27, %33 : vector<16x32xf32>
    %cst_23 = arith.constant 0.000000e+00 : f32
    %35 = vector.broadcast %cst_23 : f32 to vector<16x32xf32>
    %36 = arith.maximumf %34, %35 : vector<16x32xf32>
    %37 = vector.extract_strided_slice %7 {offsets = [16, 0], sizes = [16, 32], strides = [1, 1]} : vector<48x32xf32> to vector<16x32xf32>
    %38 = arith.truncf %37 : vector<16x32xf32> to vector<16x32xbf16>
    %c1 = arith.constant 1 : index
    %c0_24 = arith.constant 0 : index
    %c0_25 = arith.constant 0 : index
    %39 = vector.load %arg3[%c1, %c0_24, %c0_25] : memref<3x32x32xbf16, #tpu.memory_space<vmem>>, vector<1x32x32xbf16>
    %40 = vector.shape_cast %39 : vector<1x32x32xbf16> to vector<32x32xbf16>
    %cst_26 = arith.constant dense<0.000000e+00> : vector<16x32xf32>
    %41 = tpu.matmul %38, %40, %cst_26 {dimension_numbers = #tpu.dot_dimension_numbers<[1], [0], [0], [1], [0, 0, 1, 1], [], []>} : vector<16x32xbf16>, vector<32x32xbf16>, vector<16x32xf32> -> vector<16x32xf32>
    %c1_27 = arith.constant 1 : index
    %c0_28 = arith.constant 0 : index
    %c0_29 = arith.constant 0 : index
    %42 = vector.load %arg4[%c1_27, %c0_28, %c0_29] : memref<3x1x32xf32, #tpu.memory_space<vmem>>, vector<1x1x32xf32>
    %43 = vector.shape_cast %42 : vector<1x1x32xf32> to vector<1x32xf32>
    %44 = vector.broadcast %43 : vector<1x32xf32> to vector<16x32xf32>
    %45 = arith.addf %41, %44 : vector<16x32xf32>
    %cst_30 = arith.constant dense<0.000000e+00> : vector<32xf32>
    %46 = vector.multi_reduction <add>, %45, %cst_30 [0] : vector<16x32xf32> to vector<32xf32>
    %47 = vector.shape_cast %46 : vector<32xf32> to vector<1x32xf32>
    %cst_31 = arith.constant 1.600000e+01 : f32
    %48 = vector.broadcast %cst_31 : f32 to vector<1x32xf32>
    %49 = arith.divf %47, %48 : vector<1x32xf32>
    %50 = arith.mulf %45, %45 : vector<16x32xf32>
    %cst_32 = arith.constant dense<0.000000e+00> : vector<32xf32>
    %51 = vector.multi_reduction <add>, %50, %cst_32 [0] : vector<16x32xf32> to vector<32xf32>
    %52 = vector.shape_cast %51 : vector<32xf32> to vector<1x32xf32>
    %cst_33 = arith.constant 1.600000e+01 : f32
    %53 = vector.broadcast %cst_33 : f32 to vector<1x32xf32>
    %54 = arith.divf %52, %53 : vector<1x32xf32>
    %55 = vector.broadcast %49 : vector<1x32xf32> to vector<16x32xf32>
    %56 = arith.subf %45, %55 : vector<16x32xf32>
    %57 = arith.mulf %49, %49 : vector<1x32xf32>
    %58 = arith.subf %54, %57 : vector<1x32xf32>
    %cst_34 = arith.constant 9.99999974E-6 : f32
    %59 = vector.broadcast %cst_34 : f32 to vector<1x32xf32>
    %60 = arith.addf %58, %59 : vector<1x32xf32>
    %61 = math.rsqrt %60 : vector<1x32xf32>
    %62 = vector.broadcast %61 : vector<1x32xf32> to vector<16x32xf32>
    %63 = arith.mulf %56, %62 : vector<16x32xf32>
    %cst_35 = arith.constant 0.000000e+00 : f32
    %64 = vector.broadcast %cst_35 : f32 to vector<16x32xf32>
    %65 = arith.maximumf %63, %64 : vector<16x32xf32>
    %66 = vector.extract_strided_slice %7 {offsets = [32, 0], sizes = [16, 32], strides = [1, 1]} : vector<48x32xf32> to vector<16x32xf32>
    %67 = arith.truncf %66 : vector<16x32xf32> to vector<16x32xbf16>
    %c2 = arith.constant 2 : index
    %c0_36 = arith.constant 0 : index
    %c0_37 = arith.constant 0 : index
    %68 = vector.load %arg3[%c2, %c0_36, %c0_37] : memref<3x32x32xbf16, #tpu.memory_space<vmem>>, vector<1x32x32xbf16>
    %69 = vector.shape_cast %68 : vector<1x32x32xbf16> to vector<32x32xbf16>
    %cst_38 = arith.constant dense<0.000000e+00> : vector<16x32xf32>
    %70 = tpu.matmul %67, %69, %cst_38 {dimension_numbers = #tpu.dot_dimension_numbers<[1], [0], [0], [1], [0, 0, 1, 1], [], []>} : vector<16x32xbf16>, vector<32x32xbf16>, vector<16x32xf32> -> vector<16x32xf32>
    %c2_39 = arith.constant 2 : index
    %c0_40 = arith.constant 0 : index
    %c0_41 = arith.constant 0 : index
    %71 = vector.load %arg4[%c2_39, %c0_40, %c0_41] : memref<3x1x32xf32, #tpu.memory_space<vmem>>, vector<1x1x32xf32>
    %72 = vector.shape_cast %71 : vector<1x1x32xf32> to vector<1x32xf32>
    %73 = vector.broadcast %72 : vector<1x32xf32> to vector<16x32xf32>
    %74 = arith.addf %70, %73 : vector<16x32xf32>
    %cst_42 = arith.constant dense<0.000000e+00> : vector<32xf32>
    %75 = vector.multi_reduction <add>, %74, %cst_42 [0] : vector<16x32xf32> to vector<32xf32>
    %76 = vector.shape_cast %75 : vector<32xf32> to vector<1x32xf32>
    %cst_43 = arith.constant 1.600000e+01 : f32
    %77 = vector.broadcast %cst_43 : f32 to vector<1x32xf32>
    %78 = arith.divf %76, %77 : vector<1x32xf32>
    %79 = arith.mulf %74, %74 : vector<16x32xf32>
    %cst_44 = arith.constant dense<0.000000e+00> : vector<32xf32>
    %80 = vector.multi_reduction <add>, %79, %cst_44 [0] : vector<16x32xf32> to vector<32xf32>
    %81 = vector.shape_cast %80 : vector<32xf32> to vector<1x32xf32>
    %cst_45 = arith.constant 1.600000e+01 : f32
    %82 = vector.broadcast %cst_45 : f32 to vector<1x32xf32>
    %83 = arith.divf %81, %82 : vector<1x32xf32>
    %84 = vector.broadcast %78 : vector<1x32xf32> to vector<16x32xf32>
    %85 = arith.subf %74, %84 : vector<16x32xf32>
    %86 = arith.mulf %78, %78 : vector<1x32xf32>
    %87 = arith.subf %83, %86 : vector<1x32xf32>
    %cst_46 = arith.constant 9.99999974E-6 : f32
    %88 = vector.broadcast %cst_46 : f32 to vector<1x32xf32>
    %89 = arith.addf %87, %88 : vector<1x32xf32>
    %90 = math.rsqrt %89 : vector<1x32xf32>
    %91 = vector.broadcast %90 : vector<1x32xf32> to vector<16x32xf32>
    %92 = arith.mulf %85, %91 : vector<16x32xf32>
    %cst_47 = arith.constant 0.000000e+00 : f32
    %93 = vector.broadcast %cst_47 : f32 to vector<16x32xf32>
    %94 = arith.maximumf %92, %93 : vector<16x32xf32>
    %95 = arith.truncf %65 : vector<16x32xf32> to vector<16x32xbf16>
    %c0_48 = arith.constant 0 : index
    %c0_49 = arith.constant 0 : index
    %96 = vector.load %arg5[%c0_48, %c0_49] : memref<32x32xbf16, #tpu.memory_space<vmem>>, vector<32x32xbf16>
    %cst_50 = arith.constant dense<0.000000e+00> : vector<16x32xf32>
    %97 = tpu.matmul %95, %96, %cst_50 {dimension_numbers = #tpu.dot_dimension_numbers<[1], [0], [0], [1], [0, 0, 1, 1], [], []>} : vector<16x32xbf16>, vector<32x32xbf16>, vector<16x32xf32> -> vector<16x32xf32>
    %98 = arith.truncf %97 : vector<16x32xf32> to vector<16x32xbf16>
    %cst_51 = arith.constant dense<0.000000e+00> : vector<16x16xf32>
    %99 = tpu.matmul %98, %95, %cst_51 {dimension_numbers = #tpu.dot_dimension_numbers<[1], [1], [0], [0], [0, 0, 1, 0], [], []>} : vector<16x32xbf16>, vector<16x32xbf16>, vector<16x16xf32> -> vector<16x16xf32>
    %cst_52 = arith.constant 0.176776692 : f32
    %100 = vector.broadcast %cst_52 : f32 to vector<16x16xf32>
    %101 = arith.mulf %99, %100 : vector<16x16xf32>
    %102 = arith.negf %101 : vector<16x16xf32>
    %103 = math.exp %102 : vector<16x16xf32>
    %cst_53 = arith.constant 1.000000e+00 : f32
    %104 = vector.broadcast %cst_53 : f32 to vector<16x16xf32>
    %105 = arith.addf %104, %103 : vector<16x16xf32>
    %106 = arith.divf %104, %105 : vector<16x16xf32>
    %cst_54 = arith.constant dense<0xFF800000> : vector<16xf32>
    %107 = vector.multi_reduction <maximumf>, %106, %cst_54 [0] : vector<16x16xf32> to vector<16xf32>
    %108 = vector.shape_cast %107 : vector<16xf32> to vector<1x16xf32>
    %109 = vector.broadcast %108 : vector<1x16xf32> to vector<16x16xf32>
    %110 = arith.cmpf oge, %106, %109 : vector<16x16xf32>
    %cst_55 = arith.constant -1.000000e+00 : f32
    %111 = vector.broadcast %cst_55 : f32 to vector<16x16xf32>
    %112 = arith.select %110, %111, %106 : vector<16x16xi1>, vector<16x16xf32>
    %cst_56 = arith.constant dense<0xFF800000> : vector<16xf32>
    %113 = vector.multi_reduction <maximumf>, %112, %cst_56 [0] : vector<16x16xf32> to vector<16xf32>
    %114 = vector.shape_cast %113 : vector<16xf32> to vector<1x16xf32>
    %115 = vector.broadcast %114 : vector<1x16xf32> to vector<16x16xf32>
    %116 = arith.cmpf oge, %112, %115 : vector<16x16xf32>
    %cst_57 = arith.constant -1.000000e+00 : f32
    %117 = vector.broadcast %cst_57 : f32 to vector<16x16xf32>
    %118 = arith.select %116, %117, %112 : vector<16x16xi1>, vector<16x16xf32>
    %cst_58 = arith.constant dense<0xFF800000> : vector<16xf32>
    %119 = vector.multi_reduction <maximumf>, %118, %cst_58 [0] : vector<16x16xf32> to vector<16xf32>
    %120 = vector.shape_cast %119 : vector<16xf32> to vector<1x16xf32>
    %121 = vector.broadcast %120 : vector<1x16xf32> to vector<16x16xf32>
    %122 = arith.cmpf oge, %118, %121 : vector<16x16xf32>
    %cst_59 = arith.constant -1.000000e+00 : f32
    %123 = vector.broadcast %cst_59 : f32 to vector<16x16xf32>
    %124 = arith.select %122, %123, %118 : vector<16x16xi1>, vector<16x16xf32>
    %cst_60 = arith.constant dense<0xFF800000> : vector<16xf32>
    %125 = vector.multi_reduction <maximumf>, %124, %cst_60 [0] : vector<16x16xf32> to vector<16xf32>
    %126 = vector.shape_cast %125 : vector<16xf32> to vector<1x16xf32>
    %127 = vector.broadcast %126 : vector<1x16xf32> to vector<16x16xf32>
    %128 = arith.cmpf oge, %106, %127 : vector<16x16xf32>
    %cst_61 = arith.constant 0.000000e+00 : f32
    %129 = vector.broadcast %cst_61 : f32 to vector<16x16xf32>
    %130 = arith.select %128, %106, %129 : vector<16x16xi1>, vector<16x16xf32>
    %131 = vector.extract_strided_slice %0 {offsets = [16, 0], sizes = [16, 16], strides = [1, 1]} : vector<48x16xbf16> to vector<16x16xbf16>
    %132 = arith.extf %131 : vector<16x16xbf16> to vector<16x16xf32>
    %133 = arith.maximumf %132, %130 : vector<16x16xf32>
    %134 = arith.truncf %133 : vector<16x16xf32> to vector<16x16xbf16>
    %c16 = arith.constant 16 : index
    %c0_62 = arith.constant 0 : index
    %135 = vector.load %arg14[%c16, %c0_62] : memref<48x16xbf16, #tpu.memory_space<vmem>>, vector<16x16xbf16>
    tpu.vector_store %arg14[%c16, %c0_62], %134 {strides = array<i32>} : memref<48x16xbf16, #tpu.memory_space<vmem>>, vector<16x16xbf16>,
    %136 = arith.truncf %94 : vector<16x32xf32> to vector<16x32xbf16>
    %c0_63 = arith.constant 0 : index
    %c0_64 = arith.constant 0 : index
    %137 = vector.load %arg5[%c0_63, %c0_64] : memref<32x32xbf16, #tpu.memory_space<vmem>>, vector<32x32xbf16>
    %cst_65 = arith.constant dense<0.000000e+00> : vector<16x32xf32>
    %138 = tpu.matmul %136, %137, %cst_65 {dimension_numbers = #tpu.dot_dimension_numbers<[1], [0], [0], [1], [0, 0, 1, 1], [], []>} : vector<16x32xbf16>, vector<32x32xbf16>, vector<16x32xf32> -> vector<16x32xf32>
    %139 = arith.truncf %138 : vector<16x32xf32> to vector<16x32xbf16>
    %cst_66 = arith.constant dense<0.000000e+00> : vector<16x16xf32>
    %140 = tpu.matmul %139, %136, %cst_66 {dimension_numbers = #tpu.dot_dimension_numbers<[1], [1], [0], [0], [0, 0, 1, 0], [], []>} : vector<16x32xbf16>, vector<16x32xbf16>, vector<16x16xf32> -> vector<16x16xf32>
    %cst_67 = arith.constant 0.176776692 : f32
    %141 = vector.broadcast %cst_67 : f32 to vector<16x16xf32>
    %142 = arith.mulf %140, %141 : vector<16x16xf32>
    %143 = arith.negf %142 : vector<16x16xf32>
    %144 = math.exp %143 : vector<16x16xf32>
    %cst_68 = arith.constant 1.000000e+00 : f32
    %145 = vector.broadcast %cst_68 : f32 to vector<16x16xf32>
    %146 = arith.addf %145, %144 : vector<16x16xf32>
    %147 = arith.divf %145, %146 : vector<16x16xf32>
    %cst_69 = arith.constant dense<0xFF800000> : vector<16xf32>
    %148 = vector.multi_reduction <maximumf>, %147, %cst_69 [0] : vector<16x16xf32> to vector<16xf32>
    %149 = vector.shape_cast %148 : vector<16xf32> to vector<1x16xf32>
    %150 = vector.broadcast %149 : vector<1x16xf32> to vector<16x16xf32>
    %151 = arith.cmpf oge, %147, %150 : vector<16x16xf32>
    %cst_70 = arith.constant -1.000000e+00 : f32
    %152 = vector.broadcast %cst_70 : f32 to vector<16x16xf32>
    %153 = arith.select %151, %152, %147 : vector<16x16xi1>, vector<16x16xf32>
    %cst_71 = arith.constant dense<0xFF800000> : vector<16xf32>
    %154 = vector.multi_reduction <maximumf>, %153, %cst_71 [0] : vector<16x16xf32> to vector<16xf32>
    %155 = vector.shape_cast %154 : vector<16xf32> to vector<1x16xf32>
    %156 = vector.broadcast %155 : vector<1x16xf32> to vector<16x16xf32>
    %157 = arith.cmpf oge, %153, %156 : vector<16x16xf32>
    %cst_72 = arith.constant -1.000000e+00 : f32
    %158 = vector.broadcast %cst_72 : f32 to vector<16x16xf32>
    %159 = arith.select %157, %158, %153 : vector<16x16xi1>, vector<16x16xf32>
    %cst_73 = arith.constant dense<0xFF800000> : vector<16xf32>
    %160 = vector.multi_reduction <maximumf>, %159, %cst_73 [0] : vector<16x16xf32> to vector<16xf32>
    %161 = vector.shape_cast %160 : vector<16xf32> to vector<1x16xf32>
    %162 = vector.broadcast %161 : vector<1x16xf32> to vector<16x16xf32>
    %163 = arith.cmpf oge, %159, %162 : vector<16x16xf32>
    %cst_74 = arith.constant -1.000000e+00 : f32
    %164 = vector.broadcast %cst_74 : f32 to vector<16x16xf32>
    %165 = arith.select %163, %164, %159 : vector<16x16xi1>, vector<16x16xf32>
    %cst_75 = arith.constant dense<0xFF800000> : vector<16xf32>
    %166 = vector.multi_reduction <maximumf>, %165, %cst_75 [0] : vector<16x16xf32> to vector<16xf32>
    %167 = vector.shape_cast %166 : vector<16xf32> to vector<1x16xf32>
    %168 = vector.broadcast %167 : vector<1x16xf32> to vector<16x16xf32>
    %169 = arith.cmpf oge, %147, %168 : vector<16x16xf32>
    %cst_76 = arith.constant 0.000000e+00 : f32
    %170 = vector.broadcast %cst_76 : f32 to vector<16x16xf32>
    %171 = arith.select %169, %147, %170 : vector<16x16xi1>, vector<16x16xf32>
    %172 = vector.extract_strided_slice %0 {offsets = [32, 0], sizes = [16, 16], strides = [1, 1]} : vector<48x16xbf16> to vector<16x16xbf16>
    %173 = arith.extf %172 : vector<16x16xbf16> to vector<16x16xf32>
    %174 = arith.maximumf %173, %171 : vector<16x16xf32>
    %175 = arith.truncf %174 : vector<16x16xf32> to vector<16x16xbf16>
    %c32 = arith.constant 32 : index
    %c0_77 = arith.constant 0 : index
    %176 = vector.load %arg14[%c32, %c0_77] : memref<48x16xbf16, #tpu.memory_space<vmem>>, vector<16x16xbf16>
    tpu.vector_store %arg14[%c32, %c0_77], %175 {strides = array<i32>} : memref<48x16xbf16, #tpu.memory_space<vmem>>, vector<16x16xbf16>,
    %c0_78 = arith.constant 0 : index
    %c0_79 = arith.constant 0 : index
    %177 = vector.load %arg14[%c0_78, %c0_79] : memref<48x16xbf16, #tpu.memory_space<vmem>>, vector<48x16xbf16>
    %cst_80 = arith.constant dense<0.000000e+00> : vector<48x32xf32>
    %178 = tpu.matmul %177, %5, %cst_80 {dimension_numbers = #tpu.dot_dimension_numbers<[1], [0], [0], [1], [0, 0, 1, 1], [], []>} : vector<48x16xbf16>, vector<16x32xbf16>, vector<48x32xf32> -> vector<48x32xf32>
    %179 = vector.extract_strided_slice %178 {offsets = [0, 0], sizes = [16, 32], strides = [1, 1]} : vector<48x32xf32> to vector<16x32xf32>
    %180 = arith.truncf %179 : vector<16x32xf32> to vector<16x32xbf16>
    %c0_81 = arith.constant 0 : index
    %c0_82 = arith.constant 0 : index
    %c0_83 = arith.constant 0 : index
    %181 = vector.load %arg6[%c0_81, %c0_82, %c0_83] : memref<3x32x32xbf16, #tpu.memory_space<vmem>>, vector<1x32x32xbf16>
    %182 = vector.shape_cast %181 : vector<1x32x32xbf16> to vector<32x32xbf16>
    %cst_84 = arith.constant dense<0.000000e+00> : vector<16x32xf32>
    %183 = tpu.matmul %180, %182, %cst_84 {dimension_numbers = #tpu.dot_dimension_numbers<[1], [0], [0], [1], [0, 0, 1, 1], [], []>} : vector<16x32xbf16>, vector<32x32xbf16>, vector<16x32xf32> -> vector<16x32xf32>
    %184 = vector.extract_strided_slice %178 {offsets = [16, 0], sizes = [16, 32], strides = [1, 1]} : vector<48x32xf32> to vector<16x32xf32>
    %185 = arith.truncf %184 : vector<16x32xf32> to vector<16x32xbf16>
    %c1_85 = arith.constant 1 : index
    %c0_86 = arith.constant 0 : index
    %c0_87 = arith.constant 0 : index
    %186 = vector.load %arg6[%c1_85, %c0_86, %c0_87] : memref<3x32x32xbf16, #tpu.memory_space<vmem>>, vector<1x32x32xbf16>
    %187 = vector.shape_cast %186 : vector<1x32x32xbf16> to vector<32x32xbf16>
    %cst_88 = arith.constant dense<0.000000e+00> : vector<16x32xf32>
    %188 = tpu.matmul %185, %187, %cst_88 {dimension_numbers = #tpu.dot_dimension_numbers<[1], [0], [0], [1], [0, 0, 1, 1], [], []>} : vector<16x32xbf16>, vector<32x32xbf16>, vector<16x32xf32> -> vector<16x32xf32>
    %189 = arith.addf %183, %188 : vector<16x32xf32>
    %190 = vector.extract_strided_slice %178 {offsets = [32, 0], sizes = [16, 32], strides = [1, 1]} : vector<48x32xf32> to vector<16x32xf32>
    %191 = arith.truncf %190 : vector<16x32xf32> to vector<16x32xbf16>
    %c2_89 = arith.constant 2 : index
    %c0_90 = arith.constant 0 : index
    %c0_91 = arith.constant 0 : index
    %192 = vector.load %arg6[%c2_89, %c0_90, %c0_91] : memref<3x32x32xbf16, #tpu.memory_space<vmem>>, vector<1x32x32xbf16>
    %193 = vector.shape_cast %192 : vector<1x32x32xbf16> to vector<32x32xbf16>
    %cst_92 = arith.constant dense<0.000000e+00> : vector<16x32xf32>
    %194 = tpu.matmul %191, %193, %cst_92 {dimension_numbers = #tpu.dot_dimension_numbers<[1], [0], [0], [1], [0, 0, 1, 1], [], []>} : vector<16x32xbf16>, vector<32x32xbf16>, vector<16x32xf32> -> vector<16x32xf32>
    %195 = arith.addf %189, %194 : vector<16x32xf32>
    %c0_93 = arith.constant 0 : index
    %c0_94 = arith.constant 0 : index
    %196 = vector.load %arg7[%c0_93, %c0_94] : memref<1x32xf32, #tpu.memory_space<vmem>>, vector<1x32xf32>
    %197 = vector.broadcast %196 : vector<1x32xf32> to vector<16x32xf32>
    %198 = arith.addf %195, %197 : vector<16x32xf32>
    %cst_95 = arith.constant 0.000000e+00 : f32
    %199 = vector.broadcast %cst_95 : f32 to vector<16x32xf32>
    %200 = arith.maximumf %198, %199 : vector<16x32xf32>
    %c0_96 = arith.constant 0 : index
    %c0_97 = arith.constant 0 : index
    %201 = vector.load %arg15[%c0_96, %c0_97] : memref<16x128xf32, #tpu.memory_space<vmem>>, vector<16x32xf32>
    tpu.vector_store %arg15[%c0_96, %c0_97], %200 {strides = array<i32>} : memref<16x128xf32, #tpu.memory_space<vmem>>, vector<16x32xf32>,
    %202 = tpu.concatenate %36, %65, %94 in 0 : vector<16x32xf32>, vector<16x32xf32>, vector<16x32xf32> -> vector<48x32xf32>
    %203 = arith.truncf %202 : vector<48x32xf32> to vector<48x32xbf16>
    %c0_98 = arith.constant 0 : index
    %c0_99 = arith.constant 0 : index
    %c0_100 = arith.constant 0 : index
    %204 = vector.load %arg2[%c0_98, %c0_99, %c0_100] : memref<3x16x48xbf16, #tpu.memory_space<vmem>>, vector<1x16x48xbf16>
    %205 = vector.shape_cast %204 : vector<1x16x48xbf16> to vector<16x48xbf16>
    %cst_101 = arith.constant dense<0.000000e+00> : vector<16x32xf32>
    %206 = tpu.matmul %205, %203, %cst_101 {dimension_numbers = #tpu.dot_dimension_numbers<[1], [0], [0], [1], [0, 0, 1, 1], [], []>} : vector<16x48xbf16>, vector<48x32xbf16>, vector<16x32xf32> -> vector<16x32xf32>
    %c0_102 = arith.constant 0 : index
    %c32_103 = arith.constant 32 : index
    %207 = vector.load %arg15[%c0_102, %c32_103] : memref<16x128xf32, #tpu.memory_space<vmem>>, vector<16x32xf32>
    tpu.vector_store %arg15[%c0_102, %c32_103], %206 {strides = array<i32>} : memref<16x128xf32, #tpu.memory_space<vmem>>, vector<16x32xf32>,
    %c1_104 = arith.constant 1 : index
    %c0_105 = arith.constant 0 : index
    %c0_106 = arith.constant 0 : index
    %208 = vector.load %arg2[%c1_104, %c0_105, %c0_106] : memref<3x16x48xbf16, #tpu.memory_space<vmem>>, vector<1x16x48xbf16>
    %209 = vector.shape_cast %208 : vector<1x16x48xbf16> to vector<16x48xbf16>
    %cst_107 = arith.constant dense<0.000000e+00> : vector<16x32xf32>
    %210 = tpu.matmul %209, %203, %cst_107 {dimension_numbers = #tpu.dot_dimension_numbers<[1], [0], [0], [1], [0, 0, 1, 1], [], []>} : vector<16x48xbf16>, vector<48x32xbf16>, vector<16x32xf32> -> vector<16x32xf32>
    %c0_108 = arith.constant 0 : index
    %c64 = arith.constant 64 : index
    %211 = vector.load %arg15[%c0_108, %c64] : memref<16x128xf32, #tpu.memory_space<vmem>>, vector<16x32xf32>
    tpu.vector_store %arg15[%c0_108, %c64], %210 {strides = array<i32>} : memref<16x128xf32, #tpu.memory_space<vmem>>, vector<16x32xf32>,
    %c2_109 = arith.constant 2 : index
    %c0_110 = arith.constant 0 : index
    %c0_111 = arith.constant 0 : index
    %212 = vector.load %arg2[%c2_109, %c0_110, %c0_111] : memref<3x16x48xbf16, #tpu.memory_space<vmem>>, vector<1x16x48xbf16>
    %213 = vector.shape_cast %212 : vector<1x16x48xbf16> to vector<16x48xbf16>
    %cst_112 = arith.constant dense<0.000000e+00> : vector<16x32xf32>
    %214 = tpu.matmul %213, %203, %cst_112 {dimension_numbers = #tpu.dot_dimension_numbers<[1], [0], [0], [1], [0, 0, 1, 1], [], []>} : vector<16x48xbf16>, vector<48x32xbf16>, vector<16x32xf32> -> vector<16x32xf32>
    %c0_113 = arith.constant 0 : index
    %c96 = arith.constant 96 : index
    %215 = vector.load %arg15[%c0_113, %c96] : memref<16x128xf32, #tpu.memory_space<vmem>>, vector<16x32xf32>
    tpu.vector_store %arg15[%c0_113, %c96], %214 {strides = array<i32>} : memref<16x128xf32, #tpu.memory_space<vmem>>, vector<16x32xf32>,
    %c0_114 = arith.constant 0 : index
    %c0_115 = arith.constant 0 : index
    %216 = vector.load %arg15[%c0_114, %c0_115] : memref<16x128xf32, #tpu.memory_space<vmem>>, vector<16x128xf32>
    %217 = arith.truncf %216 : vector<16x128xf32> to vector<16x128xbf16>
    %c0_116 = arith.constant 0 : index
    %c0_117 = arith.constant 0 : index
    %218 = vector.load %arg14[%c0_116, %c0_117] : memref<48x16xbf16, #tpu.memory_space<vmem>>, vector<48x16xbf16>
    %cst_118 = arith.constant dense<0.000000e+00> : vector<48x128xf32>
    %219 = tpu.matmul %218, %217, %cst_118 {dimension_numbers = #tpu.dot_dimension_numbers<[1], [0], [0], [1], [0, 0, 1, 1], [], []>} : vector<48x16xbf16>, vector<16x128xbf16>, vector<48x128xf32> -> vector<48x128xf32>
    %220 = vector.extract_strided_slice %219 {offsets = [16, 0], sizes = [16, 128], strides = [1, 1]} : vector<48x128xf32> to vector<16x128xf32>
    %221 = arith.truncf %220 : vector<16x128xf32> to vector<16x128xbf16>
    %c1_119 = arith.constant 1 : index
    %c0_120 = arith.constant 0 : index
    %c0_121 = arith.constant 0 : index
    %222 = vector.load %arg8[%c1_119, %c0_120, %c0_121] : memref<3x128x32xbf16, #tpu.memory_space<vmem>>, vector<1x128x32xbf16>
    %223 = vector.shape_cast %222 : vector<1x128x32xbf16> to vector<128x32xbf16>
    %cst_122 = arith.constant dense<0.000000e+00> : vector<16x32xf32>
    %224 = tpu.matmul %221, %223, %cst_122 {dimension_numbers = #tpu.dot_dimension_numbers<[1], [0], [0], [1], [0, 0, 1, 1], [], []>} : vector<16x128xbf16>, vector<128x32xbf16>, vector<16x32xf32> -> vector<16x32xf32>
    %c1_123 = arith.constant 1 : index
    %c0_124 = arith.constant 0 : index
    %c0_125 = arith.constant 0 : index
    %225 = vector.load %arg9[%c1_123, %c0_124, %c0_125] : memref<3x1x32xf32, #tpu.memory_space<vmem>>, vector<1x1x32xf32>
    %226 = vector.shape_cast %225 : vector<1x1x32xf32> to vector<1x32xf32>
    %227 = vector.broadcast %226 : vector<1x32xf32> to vector<16x32xf32>
    %228 = arith.addf %224, %227 : vector<16x32xf32>
    %cst_126 = arith.constant dense<0.000000e+00> : vector<32xf32>
    %229 = vector.multi_reduction <add>, %228, %cst_126 [0] : vector<16x32xf32> to vector<32xf32>
    %230 = vector.shape_cast %229 : vector<32xf32> to vector<1x32xf32>
    %cst_127 = arith.constant 1.600000e+01 : f32
    %231 = vector.broadcast %cst_127 : f32 to vector<1x32xf32>
    %232 = arith.divf %230, %231 : vector<1x32xf32>
    %233 = arith.mulf %228, %228 : vector<16x32xf32>
    %cst_128 = arith.constant dense<0.000000e+00> : vector<32xf32>
    %234 = vector.multi_reduction <add>, %233, %cst_128 [0] : vector<16x32xf32> to vector<32xf32>
    %235 = vector.shape_cast %234 : vector<32xf32> to vector<1x32xf32>
    %cst_129 = arith.constant 1.600000e+01 : f32
    %236 = vector.broadcast %cst_129 : f32 to vector<1x32xf32>
    %237 = arith.divf %235, %236 : vector<1x32xf32>
    %238 = vector.broadcast %232 : vector<1x32xf32> to vector<16x32xf32>
    %239 = arith.subf %228, %238 : vector<16x32xf32>
    %240 = arith.mulf %232, %232 : vector<1x32xf32>
    %241 = arith.subf %237, %240 : vector<1x32xf32>
    %cst_130 = arith.constant 9.99999974E-6 : f32
    %242 = vector.broadcast %cst_130 : f32 to vector<1x32xf32>
    %243 = arith.addf %241, %242 : vector<1x32xf32>
    %244 = math.rsqrt %243 : vector<1x32xf32>
    %245 = vector.broadcast %244 : vector<1x32xf32> to vector<16x32xf32>
    %246 = arith.mulf %239, %245 : vector<16x32xf32>
    %cst_131 = arith.constant 0.000000e+00 : f32
    %247 = vector.broadcast %cst_131 : f32 to vector<16x32xf32>
    %248 = arith.maximumf %246, %247 : vector<16x32xf32>
    %249 = vector.extract_strided_slice %219 {offsets = [32, 0], sizes = [16, 128], strides = [1, 1]} : vector<48x128xf32> to vector<16x128xf32>
    %250 = arith.truncf %249 : vector<16x128xf32> to vector<16x128xbf16>
    %c2_132 = arith.constant 2 : index
    %c0_133 = arith.constant 0 : index
    %c0_134 = arith.constant 0 : index
    %251 = vector.load %arg8[%c2_132, %c0_133, %c0_134] : memref<3x128x32xbf16, #tpu.memory_space<vmem>>, vector<1x128x32xbf16>
    %252 = vector.shape_cast %251 : vector<1x128x32xbf16> to vector<128x32xbf16>
    %cst_135 = arith.constant dense<0.000000e+00> : vector<16x32xf32>
    %253 = tpu.matmul %250, %252, %cst_135 {dimension_numbers = #tpu.dot_dimension_numbers<[1], [0], [0], [1], [0, 0, 1, 1], [], []>} : vector<16x128xbf16>, vector<128x32xbf16>, vector<16x32xf32> -> vector<16x32xf32>
    %c2_136 = arith.constant 2 : index
    %c0_137 = arith.constant 0 : index
    %c0_138 = arith.constant 0 : index
    %254 = vector.load %arg9[%c2_136, %c0_137, %c0_138] : memref<3x1x32xf32, #tpu.memory_space<vmem>>, vector<1x1x32xf32>
    %255 = vector.shape_cast %254 : vector<1x1x32xf32> to vector<1x32xf32>
    %256 = vector.broadcast %255 : vector<1x32xf32> to vector<16x32xf32>
    %257 = arith.addf %253, %256 : vector<16x32xf32>
    %cst_139 = arith.constant dense<0.000000e+00> : vector<32xf32>
    %258 = vector.multi_reduction <add>, %257, %cst_139 [0] : vector<16x32xf32> to vector<32xf32>
    %259 = vector.shape_cast %258 : vector<32xf32> to vector<1x32xf32>
    %cst_140 = arith.constant 1.600000e+01 : f32
    %260 = vector.broadcast %cst_140 : f32 to vector<1x32xf32>
    %261 = arith.divf %259, %260 : vector<1x32xf32>
    %262 = arith.mulf %257, %257 : vector<16x32xf32>
    %cst_141 = arith.constant dense<0.000000e+00> : vector<32xf32>
    %263 = vector.multi_reduction <add>, %262, %cst_141 [0] : vector<16x32xf32> to vector<32xf32>
    %264 = vector.shape_cast %263 : vector<32xf32> to vector<1x32xf32>
    %cst_142 = arith.constant 1.600000e+01 : f32
    %265 = vector.broadcast %cst_142 : f32 to vector<1x32xf32>
    %266 = arith.divf %264, %265 : vector<1x32xf32>
    %267 = vector.broadcast %261 : vector<1x32xf32> to vector<16x32xf32>
    %268 = arith.subf %257, %267 : vector<16x32xf32>
    %269 = arith.mulf %261, %261 : vector<1x32xf32>
    %270 = arith.subf %266, %269 : vector<1x32xf32>
    %cst_143 = arith.constant 9.99999974E-6 : f32
    %271 = vector.broadcast %cst_143 : f32 to vector<1x32xf32>
    %272 = arith.addf %270, %271 : vector<1x32xf32>
    %273 = math.rsqrt %272 : vector<1x32xf32>
    %274 = vector.broadcast %273 : vector<1x32xf32> to vector<16x32xf32>
    %275 = arith.mulf %268, %274 : vector<16x32xf32>
    %cst_144 = arith.constant 0.000000e+00 : f32
    %276 = vector.broadcast %cst_144 : f32 to vector<16x32xf32>
    %277 = arith.maximumf %275, %276 : vector<16x32xf32>
    %278 = arith.truncf %248 : vector<16x32xf32> to vector<16x32xbf16>
    %c0_145 = arith.constant 0 : index
    %c0_146 = arith.constant 0 : index
    %279 = vector.load %arg10[%c0_145, %c0_146] : memref<32x32xbf16, #tpu.memory_space<vmem>>, vector<32x32xbf16>
    %cst_147 = arith.constant dense<0.000000e+00> : vector<16x32xf32>
    %280 = tpu.matmul %278, %279, %cst_147 {dimension_numbers = #tpu.dot_dimension_numbers<[1], [0], [0], [1], [0, 0, 1, 1], [], []>} : vector<16x32xbf16>, vector<32x32xbf16>, vector<16x32xf32> -> vector<16x32xf32>
    %281 = arith.truncf %280 : vector<16x32xf32> to vector<16x32xbf16>
    %cst_148 = arith.constant dense<0.000000e+00> : vector<16x16xf32>
    %282 = tpu.matmul %281, %278, %cst_148 {dimension_numbers = #tpu.dot_dimension_numbers<[1], [1], [0], [0], [0, 0, 1, 0], [], []>} : vector<16x32xbf16>, vector<16x32xbf16>, vector<16x16xf32> -> vector<16x16xf32>
    %cst_149 = arith.constant 0.176776692 : f32
    %283 = vector.broadcast %cst_149 : f32 to vector<16x16xf32>
    %284 = arith.mulf %282, %283 : vector<16x16xf32>
    %285 = arith.negf %284 : vector<16x16xf32>
    %286 = math.exp %285 : vector<16x16xf32>
    %cst_150 = arith.constant 1.000000e+00 : f32
    %287 = vector.broadcast %cst_150 : f32 to vector<16x16xf32>
    %288 = arith.addf %287, %286 : vector<16x16xf32>
    %289 = arith.divf %287, %288 : vector<16x16xf32>
    %cst_151 = arith.constant dense<0xFF800000> : vector<16xf32>
    %290 = vector.multi_reduction <maximumf>, %289, %cst_151 [0] : vector<16x16xf32> to vector<16xf32>
    %291 = vector.shape_cast %290 : vector<16xf32> to vector<1x16xf32>
    %292 = vector.broadcast %291 : vector<1x16xf32> to vector<16x16xf32>
    %293 = arith.cmpf oge, %289, %292 : vector<16x16xf32>
    %cst_152 = arith.constant -1.000000e+00 : f32
    %294 = vector.broadcast %cst_152 : f32 to vector<16x16xf32>
    %295 = arith.select %293, %294, %289 : vector<16x16xi1>, vector<16x16xf32>
    %cst_153 = arith.constant dense<0xFF800000> : vector<16xf32>
    %296 = vector.multi_reduction <maximumf>, %295, %cst_153 [0] : vector<16x16xf32> to vector<16xf32>
    %297 = vector.shape_cast %296 : vector<16xf32> to vector<1x16xf32>
    %298 = vector.broadcast %297 : vector<1x16xf32> to vector<16x16xf32>
    %299 = arith.cmpf oge, %295, %298 : vector<16x16xf32>
    %cst_154 = arith.constant -1.000000e+00 : f32
    %300 = vector.broadcast %cst_154 : f32 to vector<16x16xf32>
    %301 = arith.select %299, %300, %295 : vector<16x16xi1>, vector<16x16xf32>
    %cst_155 = arith.constant dense<0xFF800000> : vector<16xf32>
    %302 = vector.multi_reduction <maximumf>, %301, %cst_155 [0] : vector<16x16xf32> to vector<16xf32>
    %303 = vector.shape_cast %302 : vector<16xf32> to vector<1x16xf32>
    %304 = vector.broadcast %303 : vector<1x16xf32> to vector<16x16xf32>
    %305 = arith.cmpf oge, %301, %304 : vector<16x16xf32>
    %cst_156 = arith.constant -1.000000e+00 : f32
    %306 = vector.broadcast %cst_156 : f32 to vector<16x16xf32>
    %307 = arith.select %305, %306, %301 : vector<16x16xi1>, vector<16x16xf32>
    %cst_157 = arith.constant dense<0xFF800000> : vector<16xf32>
    %308 = vector.multi_reduction <maximumf>, %307, %cst_157 [0] : vector<16x16xf32> to vector<16xf32>
    %309 = vector.shape_cast %308 : vector<16xf32> to vector<1x16xf32>
    %310 = vector.broadcast %309 : vector<1x16xf32> to vector<16x16xf32>
    %311 = arith.cmpf oge, %289, %310 : vector<16x16xf32>
    %cst_158 = arith.constant 0.000000e+00 : f32
    %312 = vector.broadcast %cst_158 : f32 to vector<16x16xf32>
    %313 = arith.select %311, %289, %312 : vector<16x16xi1>, vector<16x16xf32>
    %314 = vector.extract_strided_slice %0 {offsets = [16, 0], sizes = [16, 16], strides = [1, 1]} : vector<48x16xbf16> to vector<16x16xbf16>
    %315 = arith.extf %314 : vector<16x16xbf16> to vector<16x16xf32>
    %316 = arith.maximumf %315, %313 : vector<16x16xf32>
    %317 = arith.truncf %316 : vector<16x16xf32> to vector<16x16xbf16>
    %c16_159 = arith.constant 16 : index
    %c0_160 = arith.constant 0 : index
    %318 = vector.load %arg14[%c16_159, %c0_160] : memref<48x16xbf16, #tpu.memory_space<vmem>>, vector<16x16xbf16>
    tpu.vector_store %arg14[%c16_159, %c0_160], %317 {strides = array<i32>} : memref<48x16xbf16, #tpu.memory_space<vmem>>, vector<16x16xbf16>,
    %319 = arith.truncf %277 : vector<16x32xf32> to vector<16x32xbf16>
    %c0_161 = arith.constant 0 : index
    %c0_162 = arith.constant 0 : index
    %320 = vector.load %arg10[%c0_161, %c0_162] : memref<32x32xbf16, #tpu.memory_space<vmem>>, vector<32x32xbf16>
    %cst_163 = arith.constant dense<0.000000e+00> : vector<16x32xf32>
    %321 = tpu.matmul %319, %320, %cst_163 {dimension_numbers = #tpu.dot_dimension_numbers<[1], [0], [0], [1], [0, 0, 1, 1], [], []>} : vector<16x32xbf16>, vector<32x32xbf16>, vector<16x32xf32> -> vector<16x32xf32>
    %322 = arith.truncf %321 : vector<16x32xf32> to vector<16x32xbf16>
    %cst_164 = arith.constant dense<0.000000e+00> : vector<16x16xf32>
    %323 = tpu.matmul %322, %319, %cst_164 {dimension_numbers = #tpu.dot_dimension_numbers<[1], [1], [0], [0], [0, 0, 1, 0], [], []>} : vector<16x32xbf16>, vector<16x32xbf16>, vector<16x16xf32> -> vector<16x16xf32>
    %cst_165 = arith.constant 0.176776692 : f32
    %324 = vector.broadcast %cst_165 : f32 to vector<16x16xf32>
    %325 = arith.mulf %323, %324 : vector<16x16xf32>
    %326 = arith.negf %325 : vector<16x16xf32>
    %327 = math.exp %326 : vector<16x16xf32>
    %cst_166 = arith.constant 1.000000e+00 : f32
    %328 = vector.broadcast %cst_166 : f32 to vector<16x16xf32>
    %329 = arith.addf %328, %327 : vector<16x16xf32>
    %330 = arith.divf %328, %329 : vector<16x16xf32>
    %cst_167 = arith.constant dense<0xFF800000> : vector<16xf32>
    %331 = vector.multi_reduction <maximumf>, %330, %cst_167 [0] : vector<16x16xf32> to vector<16xf32>
    %332 = vector.shape_cast %331 : vector<16xf32> to vector<1x16xf32>
    %333 = vector.broadcast %332 : vector<1x16xf32> to vector<16x16xf32>
    %334 = arith.cmpf oge, %330, %333 : vector<16x16xf32>
    %cst_168 = arith.constant -1.000000e+00 : f32
    %335 = vector.broadcast %cst_168 : f32 to vector<16x16xf32>
    %336 = arith.select %334, %335, %330 : vector<16x16xi1>, vector<16x16xf32>
    %cst_169 = arith.constant dense<0xFF800000> : vector<16xf32>
    %337 = vector.multi_reduction <maximumf>, %336, %cst_169 [0] : vector<16x16xf32> to vector<16xf32>
    %338 = vector.shape_cast %337 : vector<16xf32> to vector<1x16xf32>
    %339 = vector.broadcast %338 : vector<1x16xf32> to vector<16x16xf32>
    %340 = arith.cmpf oge, %336, %339 : vector<16x16xf32>
    %cst_170 = arith.constant -1.000000e+00 : f32
    %341 = vector.broadcast %cst_170 : f32 to vector<16x16xf32>
    %342 = arith.select %340, %341, %336 : vector<16x16xi1>, vector<16x16xf32>
    %cst_171 = arith.constant dense<0xFF800000> : vector<16xf32>
    %343 = vector.multi_reduction <maximumf>, %342, %cst_171 [0] : vector<16x16xf32> to vector<16xf32>
    %344 = vector.shape_cast %343 : vector<16xf32> to vector<1x16xf32>
    %345 = vector.broadcast %344 : vector<1x16xf32> to vector<16x16xf32>
    %346 = arith.cmpf oge, %342, %345 : vector<16x16xf32>
    %cst_172 = arith.constant -1.000000e+00 : f32
    %347 = vector.broadcast %cst_172 : f32 to vector<16x16xf32>
    %348 = arith.select %346, %347, %342 : vector<16x16xi1>, vector<16x16xf32>
    %cst_173 = arith.constant dense<0xFF800000> : vector<16xf32>
    %349 = vector.multi_reduction <maximumf>, %348, %cst_173 [0] : vector<16x16xf32> to vector<16xf32>
    %350 = vector.shape_cast %349 : vector<16xf32> to vector<1x16xf32>
    %351 = vector.broadcast %350 : vector<1x16xf32> to vector<16x16xf32>
    %352 = arith.cmpf oge, %330, %351 : vector<16x16xf32>
    %cst_174 = arith.constant 0.000000e+00 : f32
    %353 = vector.broadcast %cst_174 : f32 to vector<16x16xf32>
    %354 = arith.select %352, %330, %353 : vector<16x16xi1>, vector<16x16xf32>
    %355 = vector.extract_strided_slice %0 {offsets = [32, 0], sizes = [16, 16], strides = [1, 1]} : vector<48x16xbf16> to vector<16x16xbf16>
    %356 = arith.extf %355 : vector<16x16xbf16> to vector<16x16xf32>
    %357 = arith.maximumf %356, %354 : vector<16x16xf32>
    %358 = arith.truncf %357 : vector<16x16xf32> to vector<16x16xbf16>
    %c32_175 = arith.constant 32 : index
    %c0_176 = arith.constant 0 : index
    %359 = vector.load %arg14[%c32_175, %c0_176] : memref<48x16xbf16, #tpu.memory_space<vmem>>, vector<16x16xbf16>
    tpu.vector_store %arg14[%c32_175, %c0_176], %358 {strides = array<i32>} : memref<48x16xbf16, #tpu.memory_space<vmem>>, vector<16x16xbf16>,
    %360 = vector.extract_strided_slice %217 {offsets = [0, 0], sizes = [16, 32], strides = [1, 1]} : vector<16x128xbf16> to vector<16x32xbf16>
    %c0_177 = arith.constant 0 : index
    %c0_178 = arith.constant 0 : index
    %361 = vector.load %arg14[%c0_177, %c0_178] : memref<48x16xbf16, #tpu.memory_space<vmem>>, vector<48x16xbf16>
    %cst_179 = arith.constant dense<0.000000e+00> : vector<48x32xf32>
    %362 = tpu.matmul %361, %360, %cst_179 {dimension_numbers = #tpu.dot_dimension_numbers<[1], [0], [0], [1], [0, 0, 1, 1], [], []>} : vector<48x16xbf16>, vector<16x32xbf16>, vector<48x32xf32> -> vector<48x32xf32>
    %363 = vector.extract_strided_slice %362 {offsets = [0, 0], sizes = [16, 32], strides = [1, 1]} : vector<48x32xf32> to vector<16x32xf32>
    %364 = arith.truncf %363 : vector<16x32xf32> to vector<16x32xbf16>
    %c0_180 = arith.constant 0 : index
    %c0_181 = arith.constant 0 : index
    %c0_182 = arith.constant 0 : index
    %365 = vector.load %arg11[%c0_180, %c0_181, %c0_182] : memref<3x32x32xbf16, #tpu.memory_space<vmem>>, vector<1x32x32xbf16>
    %366 = vector.shape_cast %365 : vector<1x32x32xbf16> to vector<32x32xbf16>
    %cst_183 = arith.constant dense<0.000000e+00> : vector<16x32xf32>
    %367 = tpu.matmul %364, %366, %cst_183 {dimension_numbers = #tpu.dot_dimension_numbers<[1], [0], [0], [1], [0, 0, 1, 1], [], []>} : vector<16x32xbf16>, vector<32x32xbf16>, vector<16x32xf32> -> vector<16x32xf32>
    %368 = vector.extract_strided_slice %362 {offsets = [16, 0], sizes = [16, 32], strides = [1, 1]} : vector<48x32xf32> to vector<16x32xf32>
    %369 = arith.truncf %368 : vector<16x32xf32> to vector<16x32xbf16>
    %c1_184 = arith.constant 1 : index
    %c0_185 = arith.constant 0 : index
    %c0_186 = arith.constant 0 : index
    %370 = vector.load %arg11[%c1_184, %c0_185, %c0_186] : memref<3x32x32xbf16, #tpu.memory_space<vmem>>, vector<1x32x32xbf16>
    %371 = vector.shape_cast %370 : vector<1x32x32xbf16> to vector<32x32xbf16>
    %cst_187 = arith.constant dense<0.000000e+00> : vector<16x32xf32>
    %372 = tpu.matmul %369, %371, %cst_187 {dimension_numbers = #tpu.dot_dimension_numbers<[1], [0], [0], [1], [0, 0, 1, 1], [], []>} : vector<16x32xbf16>, vector<32x32xbf16>, vector<16x32xf32> -> vector<16x32xf32>
    %373 = arith.addf %367, %372 : vector<16x32xf32>
    %374 = vector.extract_strided_slice %362 {offsets = [32, 0], sizes = [16, 32], strides = [1, 1]} : vector<48x32xf32> to vector<16x32xf32>
    %375 = arith.truncf %374 : vector<16x32xf32> to vector<16x32xbf16>
    %c2_188 = arith.constant 2 : index
    %c0_189 = arith.constant 0 : index
    %c0_190 = arith.constant 0 : index
    %376 = vector.load %arg11[%c2_188, %c0_189, %c0_190] : memref<3x32x32xbf16, #tpu.memory_space<vmem>>, vector<1x32x32xbf16>
    %377 = vector.shape_cast %376 : vector<1x32x32xbf16> to vector<32x32xbf16>
    %cst_191 = arith.constant dense<0.000000e+00> : vector<16x32xf32>
    %378 = tpu.matmul %375, %377, %cst_191 {dimension_numbers = #tpu.dot_dimension_numbers<[1], [0], [0], [1], [0, 0, 1, 1], [], []>} : vector<16x32xbf16>, vector<32x32xbf16>, vector<16x32xf32> -> vector<16x32xf32>
    %379 = arith.addf %373, %378 : vector<16x32xf32>
    %c0_192 = arith.constant 0 : index
    %c0_193 = arith.constant 0 : index
    %380 = vector.load %arg12[%c0_192, %c0_193] : memref<1x32xf32, #tpu.memory_space<vmem>>, vector<1x32xf32>
    %381 = vector.broadcast %380 : vector<1x32xf32> to vector<16x32xf32>
    %382 = arith.addf %379, %381 : vector<16x32xf32>
    %cst_194 = arith.constant 0.000000e+00 : f32
    %383 = vector.broadcast %cst_194 : f32 to vector<16x32xf32>
    %384 = arith.maximumf %382, %383 : vector<16x32xf32>
    %c0_195 = arith.constant 0 : index
    %c0_196 = arith.constant 0 : index
    %385 = vector.load %arg13[%c0_195, %c0_196] : memref<16x32xf32, #tpu.memory_space<vmem>>, vector<16x32xf32>
    tpu.vector_store %arg13[%c0_195, %c0_196], %384 {strides = array<i32>} : memref<16x32xf32, #tpu.memory_space<vmem>>, vector<16x32xf32>,
    return
  }
}

</mosaic_0001>

<llo_original>
// kernel: dgm_gearnet_edge_forward.1
$region0: #{dgm_gearnet_edge_forward.1}
  #allocation0 [shape = 'u32[]', space=smem, size = 0x4, offset = 0x4, fixed_abs, tag = 'smem constant byte address 0x4 - core index']
  #allocation1 [shape = 'u32[72,128]{1,0:T(1,128)}', space=vmem, size = 0x9000, scoped, tag = 'internal scratch']
  #allocation2 [shape = 'bf16[48,16]{1,0:T(8,128)(2,1)}', space=vmem, size = 0x3000, scoped, tag = 'scratch operand']
  #allocation3 [shape = 'f32[16,128]{1,0:T(8,128)}', space=vmem, size = 0x2000, scoped, tag = 'scratch operand']
  %s0 = inlined_call_operand.vmem [shape: bf16[48,16], index: 0, kind: input, shape index: {}]
  %s1 = inlined_call_operand.vmem [shape: f32[16,32], index: 1, kind: input, shape index: {}]
  %s2 = inlined_call_operand.vmem [shape: bf16[3,16,48], index: 2, kind: input, shape index: {}]
  %s3 = inlined_call_operand.vmem [shape: bf16[3,32,32], index: 3, kind: input, shape index: {}]
  %s4 = inlined_call_operand.vmem [shape: f32[3,1,32], index: 4, kind: input, shape index: {}]
  %s5 = inlined_call_operand.vmem [shape: bf16[32,32], index: 5, kind: input, shape index: {}]
  %s6 = inlined_call_operand.vmem [shape: bf16[3,32,32], index: 6, kind: input, shape index: {}]
  %s7 = inlined_call_operand.vmem [shape: f32[1,32], index: 7, kind: input, shape index: {}]
  %s8 = inlined_call_operand.vmem [shape: bf16[3,128,32], index: 8, kind: input, shape index: {}]
  %s9 = inlined_call_operand.vmem [shape: f32[3,1,32], index: 9, kind: input, shape index: {}]
  %s10 = inlined_call_operand.vmem [shape: bf16[32,32], index: 10, kind: input, shape index: {}]
  %s11 = inlined_call_operand.vmem [shape: bf16[3,32,32], index: 11, kind: input, shape index: {}]
  %s12 = inlined_call_operand.vmem [shape: f32[1,32], index: 12, kind: input, shape index: {}]
  %s13 = inlined_call_operand.vmem [shape: f32[16,32], index: 13, kind: output, shape index: {}]
  %s14 = sld [smem:[#allocation0]]
  $region62: #{dgm_gearnet_edge_forward.1} parent=0
    _
  %s16 = ssub.s32 1, %s14
  %s17 = scalar_select 0, %s16, %s14
  // Predicated region
  $region2: #{dgm_gearnet_edge_forward.1} parent=0 // pred_check
    _
  $region3: #{dgm_gearnet_edge_forward.1} parent=0 // pred_check_branch
    %19 = sbr.rel (0) target = $region5
  $region4: #{dgm_gearnet_edge_forward.1} parent=0 // pred_region
    _
  $region5: #{dgm_gearnet_edge_forward.1} parent=0 // pred_fallthru
    _
  // Predicated region
  $region6: #{dgm_gearnet_edge_forward.1} parent=0 // pred_check
    _
  $region7: #{dgm_gearnet_edge_forward.1} parent=0 // pred_check_branch
    %21 = sbr.rel (0) target = $region9
  $region8: #{dgm_gearnet_edge_forward.1} parent=0 // pred_region
    _
  $region9: #{dgm_gearnet_edge_forward.1} parent=0 // pred_fallthru
    _
  // Predicated region
  $region10: #{dgm_gearnet_edge_forward.1} parent=0 // pred_check
    _
  $region11: #{dgm_gearnet_edge_forward.1} parent=0 // pred_check_branch
    %23 = sbr.rel (0) target = $region13
  $region12: #{dgm_gearnet_edge_forward.1} parent=0 // pred_region
    _
  $region13: #{dgm_gearnet_edge_forward.1} parent=0 // pred_fallthru
    _
  // Predicated region
  $region14: #{dgm_gearnet_edge_forward.1} parent=0 // pred_check
    _
  $region15: #{dgm_gearnet_edge_forward.1} parent=0 // pred_check_branch
    %25 = sbr.rel (0) target = $region17
  $region16: #{dgm_gearnet_edge_forward.1} parent=0 // pred_region
    _
  $region17: #{dgm_gearnet_edge_forward.1} parent=0 // pred_fallthru
    _
  // Predicated region
  $region18: #{dgm_gearnet_edge_forward.1} parent=0 // pred_check
    _
  $region19: #{dgm_gearnet_edge_forward.1} parent=0 // pred_check_branch
    %27 = sbr.rel (0) target = $region21
  $region20: #{dgm_gearnet_edge_forward.1} parent=0 // pred_region
    _
  $region21: #{dgm_gearnet_edge_forward.1} parent=0 // pred_fallthru
    _
  // Predicated region
  $region22: #{dgm_gearnet_edge_forward.1} parent=0 // pred_check
    _
  $region23: #{dgm_gearnet_edge_forward.1} parent=0 // pred_check_branch
    %29 = sbr.rel (0) target = $region25
  $region24: #{dgm_gearnet_edge_forward.1} parent=0 // pred_region
    _
  $region25: #{dgm_gearnet_edge_forward.1} parent=0 // pred_fallthru
    _
  // Predicated region
  $region26: #{dgm_gearnet_edge_forward.1} parent=0 // pred_check
    _
  $region27: #{dgm_gearnet_edge_forward.1} parent=0 // pred_check_branch
    %31 = sbr.rel (0) target = $region29
  $region28: #{dgm_gearnet_edge_forward.1} parent=0 // pred_region
    _
  $region29: #{dgm_gearnet_edge_forward.1} parent=0 // pred_fallthru
    _
  // Predicated region
  $region30: #{dgm_gearnet_edge_forward.1} parent=0 // pred_check
    _
  $region31: #{dgm_gearnet_edge_forward.1} parent=0 // pred_check_branch
    %33 = sbr.rel (0) target = $region33
  $region32: #{dgm_gearnet_edge_forward.1} parent=0 // pred_region
    _
  $region33: #{dgm_gearnet_edge_forward.1} parent=0 // pred_fallthru
    _
  // Predicated region
  $region34: #{dgm_gearnet_edge_forward.1} parent=0 // pred_check
    _
  $region35: #{dgm_gearnet_edge_forward.1} parent=0 // pred_check_branch
    %35 = sbr.rel (0) target = $region37
  $region36: #{dgm_gearnet_edge_forward.1} parent=0 // pred_region
    _
  $region37: #{dgm_gearnet_edge_forward.1} parent=0 // pred_fallthru
    _
  // Predicated region
  $region38: #{dgm_gearnet_edge_forward.1} parent=0 // pred_check
    _
  $region39: #{dgm_gearnet_edge_forward.1} parent=0 // pred_check_branch
    %37 = sbr.rel (0) target = $region41
  $region40: #{dgm_gearnet_edge_forward.1} parent=0 // pred_region
    _
  $region41: #{dgm_gearnet_edge_forward.1} parent=0 // pred_fallthru
    _
  // Predicated region
  $region42: #{dgm_gearnet_edge_forward.1} parent=0 // pred_check
    _
  $region43: #{dgm_gearnet_edge_forward.1} parent=0 // pred_check_branch
    %39 = sbr.rel (0) target = $region45
  $region44: #{dgm_gearnet_edge_forward.1} parent=0 // pred_region
    _
  $region45: #{dgm_gearnet_edge_forward.1} parent=0 // pred_fallthru
    _
  // Predicated region
  $region46: #{dgm_gearnet_edge_forward.1} parent=0 // pred_check
    _
  $region47: #{dgm_gearnet_edge_forward.1} parent=0 // pred_check_branch
    %41 = sbr.rel (0) target = $region49
  $region48: #{dgm_gearnet_edge_forward.1} parent=0 // pred_region
    _
  $region49: #{dgm_gearnet_edge_forward.1} parent=0 // pred_fallthru
    _
  // Predicated region
  $region50: #{dgm_gearnet_edge_forward.1} parent=0 // pred_check
    _
  $region51: #{dgm_gearnet_edge_forward.1} parent=0 // pred_check_branch
    %43 = sbr.rel (0) target = $region53
  $region52: #{dgm_gearnet_edge_forward.1} parent=0 // pred_region
    _
  $region53: #{dgm_gearnet_edge_forward.1} parent=0 // pred_fallthru
    _
  %v45 = vld [vmem:[%s0] sm:$0xf]
  %v46 = vld [vmem:[%s0 + $0x4] sm:$0xf]
  %v47 = vld [vmem:[%s0 + $0x8] sm:$0xf]
  %v48 = vld [vmem:[%s0 + $0xc] sm:$0xf]
  %v49 = vld [vmem:[%s0 + $0x10] sm:$0xf]
  %v50 = vld [vmem:[%s0 + $0x14] sm:$0xf]
  %vm51 = vcmask 125952
  %52 = vst.msk [vmem:[#allocation2] sm:$0xf] %vm51, %v45
  %53 = vst.msk [vmem:[#allocation2 + $0x4] sm:$0xf] %vm51, %v46
  %54 = vst.msk [vmem:[#allocation2 + $0x8] sm:$0xf] %vm51, %v47
  %55 = vst.msk [vmem:[#allocation2 + $0xc] sm:$0xf] %vm51, %v48
  %56 = vst.msk [vmem:[#allocation2 + $0x10] sm:$0xf] %vm51, %v49
  %57 = vst.msk [vmem:[#allocation2 + $0x14] sm:$0xf] %vm51, %v50
  %v58 = vld [vmem:[%s1] sm:$0xff]
  %v59 = vld [vmem:[%s1 + $0x8] sm:$0xff]
  %vm60 = vcmask 261120
  %61 = vst.msk [vmem:[#allocation3] sm:$0xff] %vm60, %v58
  %62 = vst.msk [vmem:[#allocation3 + $0x8] sm:$0xff] %vm60, %v59
  %v63 = vld [vmem:[#allocation3] sm:$0xff]
  %v64 = vld [vmem:[#allocation3 + $0x8] sm:$0xff]
  %v65 = vpack.c.bf16 %v64, %v63
  %v66 = vld [vmem:[#allocation2] sm:$0xf]
  %v67 = vld [vmem:[#allocation2 + $0x4] sm:$0xf]
  %v68 = vld [vmem:[#allocation2 + $0x8] sm:$0xf]
  %v69 = vld [vmem:[#allocation2 + $0xc] sm:$0xf]
  %v70 = vld [vmem:[#allocation2 + $0x10] sm:$0xf]
  %v71 = vld [vmem:[#allocation2 + $0x14] sm:$0xf]
  %v78 = vunpack.c.l.b16 %v66
  %v79 = vunpack.c.l.b16 %v67
  %v80 = vunpack.c.l.b16 %v68
  %v81 = vunpack.c.l.b16 %v69
  %v82 = vunpack.c.l.b16 %v70
  %v83 = vunpack.c.l.b16 %v71
  %v84 = vpack.c.b16 %v79, %v78
  %v85 = vpack.c.b16 %v81, %v80
  %v86 = vpack.c.b16 %v83, %v82
  %vm87 = vcmask 130048
  %v89 = vsel %vm87, %v84, 0
  %v92 = vsel %vm87, %v85, 0
  %v95 = vsel %vm87, %v86, 0
  %97 = vmatpush.bf16.msra.mxu0 0
  %98 = vmatpush.bf16.msra.mxu0 0
  %99 = vmatpush.bf16.msra.mxu0 0
  %100 = vmatpush.bf16.msra.mxu0 0
  %101 = vmatpush.bf16.msra.mxu0 0
  %102 = vmatpush.bf16.msra.mxu0 0
  %103 = vmatpush.bf16.msra.mxu0 0
  %104 = vmatpush.bf16.msra.mxu0 %v65
  %105 = vmatmul.bf16.gmra.mxu0 %v89
  %v106 = vpop.f32.mrf.mxu0
  %v107 = vadd.f32 0.0, %v106
  %v108 = vpop.f32.mrf.mxu0
  %v109 = vadd.f32 0.0, %v108
  %110 = vmatmul.bf16.gmra.mxu0 %v92
  %v111 = vpop.f32.mrf.mxu0
  %v112 = vadd.f32 0.0, %v111
  %v113 = vpop.f32.mrf.mxu0
  %v114 = vadd.f32 0.0, %v113
  %115 = vmatmul.bf16.gmra.mxu0 %v95
  %v116 = vpop.f32.mrf.mxu0
  %v117 = vadd.f32 0.0, %v116
  %v118 = vpop.f32.mrf.mxu0
  %v119 = vadd.f32 0.0, %v118
  %120 = vdwg.mxu0
  %v121 = vpack.c.bf16 %v109, %v107
  %v122 = vld [vmem:[%s3] sm:$0xf]
  %v123 = vld [vmem:[%s3 + $0x4] sm:$0xf]
  %v124 = vld [vmem:[%s3 + $0x8] sm:$0xf]
  %v125 = vld [vmem:[%s3 + $0xc] sm:$0xf]
  %v126 = vld [vmem:[%s4] sm:$0x1]
  %v128 = vperm.slane %v126, 0
  %v134 = vunpack.c.l.b16 %v122
  %v135 = vunpack.c.l.b16 %v123
  %v136 = vunpack.c.l.b16 %v124
  %v137 = vunpack.c.l.b16 %v125
  %v138 = vpack.c.b16 %v135, %v134
  %v139 = vpack.c.b16 %v137, %v136
  %v143 = vsel %vm60, %v121, 0
  %145 = vmatpush.bf16.msra.mxu0 0
  %146 = vmatpush.bf16.msra.mxu0 0
  %147 = vmatpush.bf16.msra.mxu0 0
  %148 = vmatpush.bf16.msra.mxu0 0
  %149 = vmatpush.bf16.msra.mxu0 0
  %150 = vmatpush.bf16.msra.mxu0 0
  %151 = vmatpush.bf16.msra.mxu0 %v139
  %152 = vmatpush.bf16.msra.mxu0 %v138
  %153 = vmatmul.bf16.gmra.mxu0 %v143
  %v154 = vpop.f32.mrf.mxu0
  %v155 = vadd.f32 %v128, %v154
  %v156 = vpop.f32.mrf.mxu0
  %v157 = vadd.f32 %v128, %v156
  %158 = vdwg.mxu0
  %v159 = vsel %vm60, %v155, 0.0
  %v160 = vsel %vm60, %v157, 0.0
  %v161 = vadd.f32 %v159, %v160
  %v162 = vrot.slane %v161, 4
  %v163 = vadd.f32 %v161, %v162
  %v164 = vrot.slane %v163, 2
  %v165 = vadd.f32 %v163, %v164
  %v166 = vrot.slane %v165, 1
  %v167 = vadd.f32 %v165, %v166
  %v168 = vrcp.pop 16.0
  %v169 = vmul.f32 16.0, %v168
  %v170 = vsub.f32 1.0, %v169
  %v171 = vmul.f32 %v168, %v170
  %v172 = vadd.f32 %v168, %v171
  %vm173 = vweird.f32 %v168
  %v174 = vsel %vm173, %v168, %v172
  %v175 = vmul.f32 %v167, %v174
  %v176 = vmul.f32 %v155, %v155
  %v177 = vmul.f32 %v157, %v157
  %v178 = vsel %vm60, %v176, 0.0
  %v179 = vsel %vm60, %v177, 0.0
  %v180 = vadd.f32 %v178, %v179
  %v181 = vrot.slane %v180, 4
  %v182 = vadd.f32 %v180, %v181
  %v183 = vrot.slane %v182, 2
  %v184 = vadd.f32 %v182, %v183
  %v185 = vrot.slane %v184, 1
  %v186 = vadd.f32 %v184, %v185
  %v187 = vmul.f32 %v186, %v174
  %v188 = vsub.f32 %v155, %v175
  %v189 = vsub.f32 %v157, %v175
  %v190 = vmul.f32 %v175, %v175
  %v191 = vsub.f32 %v187, %v190
  %v192 = vadd.f32 %v191, 1e-05
  %v193 = vrsqrt.pop %v192
  %v194 = vmul.f32 %v193, %v192
  %v195 = vmul.f32 %v194, %v193
  %v196 = vmul.f32 0.5, %v195
  %v197 = vsub.f32 1.5, %v196
  %v198 = vmul.f32 %v193, %v197
  %vm199 = vweird.f32 %v192
  %vm200 = vweird.f32 %v193
  %vm201 = vmor %vm199, %vm200
  %v202 = vsel %vm201, %v193, %v198
  %v203 = vmul.f32 %v188, %v202
  %v204 = vmul.f32 %v189, %v202
  %v205 = vmax.f32 %v203, 0.0
  %v206 = vmax.f32 %v204, 0.0
  %v207 = vpack.c.bf16 %v114, %v112
  %s208 = scalar_lea.vmem %s3, 16
  %v209 = vld [vmem:[%s208] sm:$0xf]
  %v210 = vld [vmem:[%s208 + $0x4] sm:$0xf]
  %v211 = vld [vmem:[%s208 + $0x8] sm:$0xf]
  %v212 = vld [vmem:[%s208 + $0xc] sm:$0xf]
  %s213 = scalar_lea.vmem %s4, 1
  %v214 = vld [vmem:[%s213] sm:$0x1]
  %v216 = vperm.slane %v214, 0
  %v222 = vunpack.c.l.b16 %v209
  %v223 = vunpack.c.l.b16 %v210
  %v224 = vunpack.c.l.b16 %v211
  %v225 = vunpack.c.l.b16 %v212
  %v226 = vpack.c.b16 %v223, %v222
  %v227 = vpack.c.b16 %v225, %v224
  %v231 = vsel %vm60, %v207, 0
  %233 = vmatpush.bf16.msra.mxu0 0
  %234 = vmatpush.bf16.msra.mxu0 0
  %235 = vmatpush.bf16.msra.mxu0 0
  %236 = vmatpush.bf16.msra.mxu0 0
  %237 = vmatpush.bf16.msra.mxu0 0
  %238 = vmatpush.bf16.msra.mxu0 0
  %239 = vmatpush.bf16.msra.mxu0 %v227
  %240 = vmatpush.bf16.msra.mxu0 %v226
  %241 = vmatmul.bf16.gmra.mxu0 %v231
  %v242 = vpop.f32.mrf.mxu0
  %v243 = vadd.f32 %v216, %v242
  %v244 = vpop.f32.mrf.mxu0
  %v245 = vadd.f32 %v216, %v244
  %246 = vdwg.mxu0
  %v247 = vsel %vm60, %v243, 0.0
  %v248 = vsel %vm60, %v245, 0.0
  %v249 = vadd.f32 %v247, %v248
  %v250 = vrot.slane %v249, 4
  %v251 = vadd.f32 %v249, %v250
  %v252 = vrot.slane %v251, 2
  %v253 = vadd.f32 %v251, %v252
  %v254 = vrot.slane %v253, 1
  %v255 = vadd.f32 %v253, %v254
  %v256 = vmul.f32 %v255, %v174
  %v257 = vmul.f32 %v243, %v243
  %v258 = vmul.f32 %v245, %v245
  %v259 = vsel %vm60, %v257, 0.0
  %v260 = vsel %vm60, %v258, 0.0
  %v261 = vadd.f32 %v259, %v260
  %v262 = vrot.slane %v261, 4
  %v263 = vadd.f32 %v261, %v262
  %v264 = vrot.slane %v263, 2
  %v265 = vadd.f32 %v263, %v264
  %v266 = vrot.slane %v265, 1
  %v267 = vadd.f32 %v265, %v266
  %v268 = vmul.f32 %v267, %v174
  %v269 = vsub.f32 %v243, %v256
  %v270 = vsub.f32 %v245, %v256
  %v271 = vmul.f32 %v256, %v256
  %v272 = vsub.f32 %v268, %v271
  %v273 = vadd.f32 %v272, 1e-05
  %v274 = vrsqrt.pop %v273
  %v275 = vmul.f32 %v274, %v273
  %v276 = vmul.f32 %v275, %v274
  %v277 = vmul.f32 0.5, %v276
  %v278 = vsub.f32 1.5, %v277
  %v279 = vmul.f32 %v274, %v278
  %vm280 = vweird.f32 %v273
  %vm281 = vweird.f32 %v274
  %vm282 = vmor %vm280, %vm281
  %v283 = vsel %vm282, %v274, %v279
  %v284 = vmul.f32 %v269, %v283
  %v285 = vmul.f32 %v270, %v283
  %v286 = vmax.f32 %v284, 0.0
  %v287 = vmax.f32 %v285, 0.0
  %v288 = vpack.c.bf16 %v119, %v117
  %s289 = scalar_lea.vmem %s3, 32
  %v290 = vld [vmem:[%s289] sm:$0xf]
  %v291 = vld [vmem:[%s289 + $0x4] sm:$0xf]
  %v292 = vld [vmem:[%s289 + $0x8] sm:$0xf]
  %v293 = vld [vmem:[%s289 + $0xc] sm:$0xf]
  %s294 = scalar_lea.vmem %s4, 2
  %v295 = vld [vmem:[%s294] sm:$0x1]
  %v297 = vperm.slane %v295, 0
  %v303 = vunpack.c.l.b16 %v290
  %v304 = vunpack.c.l.b16 %v291
  %v305 = vunpack.c.l.b16 %v292
  %v306 = vunpack.c.l.b16 %v293
  %v307 = vpack.c.b16 %v304, %v303
  %v308 = vpack.c.b16 %v306, %v305
  %v312 = vsel %vm60, %v288, 0
  %314 = vmatpush.bf16.msra.mxu0 0
  %315 = vmatpush.bf16.msra.mxu0 0
  %316 = vmatpush.bf16.msra.mxu0 0
  %317 = vmatpush.bf16.msra.mxu0 0
  %318 = vmatpush.bf16.msra.mxu0 0
  %319 = vmatpush.bf16.msra.mxu0 0
  %320 = vmatpush.bf16.msra.mxu0 %v308
  %321 = vmatpush.bf16.msra.mxu0 %v307
  %322 = vmatmul.bf16.gmra.mxu0 %v312
  %v323 = vpop.f32.mrf.mxu0
  %v324 = vadd.f32 %v297, %v323
  %v325 = vpop.f32.mrf.mxu0
  %v326 = vadd.f32 %v297, %v325
  %327 = vdwg.mxu0
  %v328 = vsel %vm60, %v324, 0.0
  %v329 = vsel %vm60, %v326, 0.0
  %v330 = vadd.f32 %v328, %v329
  %v331 = vrot.slane %v330, 4
  %v332 = vadd.f32 %v330, %v331
  %v333 = vrot.slane %v332, 2
  %v334 = vadd.f32 %v332, %v333
  %v335 = vrot.slane %v334, 1
  %v336 = vadd.f32 %v334, %v335
  %v337 = vmul.f32 %v336, %v174
  %v338 = vmul.f32 %v324, %v324
  %v339 = vmul.f32 %v326, %v326
  %v340 = vsel %vm60, %v338, 0.0
  %v341 = vsel %vm60, %v339, 0.0
  %v342 = vadd.f32 %v340, %v341
  %v343 = vrot.slane %v342, 4
  %v344 = vadd.f32 %v342, %v343
  %v345 = vrot.slane %v344, 2
  %v346 = vadd.f32 %v344, %v345
  %v347 = vrot.slane %v346, 1
  %v348 = vadd.f32 %v346, %v347
  %v349 = vmul.f32 %v348, %v174
  %v350 = vsub.f32 %v324, %v337
  %v351 = vsub.f32 %v326, %v337
  %v352 = vmul.f32 %v337, %v337
  %v353 = vsub.f32 %v349, %v352
  %v354 = vadd.f32 %v353, 1e-05
  %v355 = vrsqrt.pop %v354
  %v356 = vmul.f32 %v355, %v354
  %v357 = vmul.f32 %v356, %v355
  %v358 = vmul.f32 0.5, %v357
  %v359 = vsub.f32 1.5, %v358
  %v360 = vmul.f32 %v355, %v359
  %vm361 = vweird.f32 %v354
  %vm362 = vweird.f32 %v355
  %vm363 = vmor %vm361, %vm362
  %v364 = vsel %vm363, %v355, %v360
  %v365 = vmul.f32 %v350, %v364
  %v366 = vmul.f32 %v351, %v364
  %v367 = vmax.f32 %v365, 0.0
  %v368 = vmax.f32 %v366, 0.0
  %v369 = vpack.c.bf16 %v287, %v286
  %v370 = vld [vmem:[%s5] sm:$0xf]
  %v371 = vld [vmem:[%s5 + $0x4] sm:$0xf]
  %v372 = vld [vmem:[%s5 + $0x8] sm:$0xf]
  %v373 = vld [vmem:[%s5 + $0xc] sm:$0xf]
  %v378 = vunpack.c.l.b16 %v370
  %v379 = vunpack.c.l.b16 %v371
  %v380 = vunpack.c.l.b16 %v372
  %v381 = vunpack.c.l.b16 %v373
  %v382 = vpack.c.b16 %v379, %v378
  %v383 = vpack.c.b16 %v381, %v380
  %v387 = vsel %vm60, %v369, 0
  %389 = vmatpush.bf16.msra.mxu0 0
  %390 = vmatpush.bf16.msra.mxu0 0
  %391 = vmatpush.bf16.msra.mxu0 0
  %392 = vmatpush.bf16.msra.mxu0 0
  %393 = vmatpush.bf16.msra.mxu0 0
  %394 = vmatpush.bf16.msra.mxu0 0
  %395 = vmatpush.bf16.msra.mxu0 %v383
  %396 = vmatpush.bf16.msra.mxu0 %v382
  %397 = vmatmul.bf16.gmra.mxu0 %v387
  %v398 = vpop.f32.mrf.mxu0
  %v399 = vadd.f32 0.0, %v398
  %v400 = vpop.f32.mrf.mxu0
  %v401 = vadd.f32 0.0, %v400
  %402 = vdwg.mxu0
  %v403 = vpack.c.bf16 %v401, %v399
  %v405 = vsel %vm60, %v403, 0
  %407 = vmatpush.bf16.xpose.msra.mxu0 0
  %408 = vmatpush.bf16.xpose.msra.mxu0 0
  %409 = vmatpush.bf16.xpose.msra.mxu0 0
  %410 = vmatpush.bf16.xpose.msra.mxu0 0
  %411 = vmatpush.bf16.xpose.msra.mxu0 0
  %412 = vmatpush.bf16.xpose.msra.mxu0 0
  %413 = vmatpush.bf16.xpose.msra.mxu0 0
  %414 = vmatpush.bf16.xpose.msra.mxu0 %v387
  %415 = vmatmul.bf16.gmra.mxu0 %v405
  %v416 = vpop.f32.mrf.mxu0
  %v417 = vadd.f32 0.0, %v416
  %v418 = vpop.f32.mrf.mxu0
  %v419 = vadd.f32 0.0, %v418
  %420 = vdwg.mxu0
  %v421 = vmul.f32 %v417, 0.17677669
  %v422 = vmul.f32 %v419, 0.17677669
  %v423 = vxor.u32 %v421, 2147483648
  %v424 = vxor.u32 %v422, 2147483648
  %v425 = vmul.f32 %v423, 1.442695
  %v426 = vpow.pop %v425
  %v427 = vmul.f32 %v424, 1.442695
  %v428 = vpow.pop %v427
  %v429 = vadd.f32 %v426, 1.0
  %v430 = vadd.f32 %v428, 1.0
  %v431 = vrcp.pop %v429
  %v432 = vmul.f32 %v429, %v431
  %v433 = vsub.f32 1.0, %v432
  %v434 = vmul.f32 %v431, %v433
  %v435 = vadd.f32 %v431, %v434
  %vm436 = vweird.f32 %v429
  %vm437 = vweird.f32 %v431
  %vm438 = vmor %vm436, %vm437
  %v439 = vsel %vm438, %v431, %v435
  %v440 = vand.u32 2147483647, %v429
  %vm441 = vcmp.eq.f32.partialorder %v440, 8.507059e+37
  %v442 = vand.u32 %v429, 2147483648
  %v443 = vor.u32 1.1754944e-38, %v442
  %v444 = vsel %vm441, %v443, %v439
  %v445 = vmul.f32 1.0, %v444
  %v446 = vrcp.pop %v430
  %v447 = vmul.f32 %v430, %v446
  %v448 = vsub.f32 1.0, %v447
  %v449 = vmul.f32 %v446, %v448
  %v450 = vadd.f32 %v446, %v449
  %vm451 = vweird.f32 %v430
  %vm452 = vweird.f32 %v446
  %vm453 = vmor %vm451, %vm452
  %v454 = vsel %vm453, %v446, %v450
  %v455 = vand.u32 2147483647, %v430
  %vm456 = vcmp.eq.f32.partialorder %v455, 8.507059e+37
  %v457 = vand.u32 %v430, 2147483648
  %v458 = vor.u32 1.1754944e-38, %v457
  %v459 = vsel %vm456, %v458, %v454
  %v460 = vmul.f32 1.0, %v459
  %v461 = vsel %vm87, %v445, -inf
  %v462 = vsel %vm87, %v460, -inf
  %v463 = vmax.f32 %v461, %v462
  %v464 = vrot.slane %v463, 4
  %v465 = vmax.f32 %v463, %v464
  %v466 = vrot.slane %v465, 2
  %v467 = vmax.f32 %v465, %v466
  %v468 = vrot.slane %v467, 1
  %v469 = vmax.f32 %v467, %v468
  %vm470 = vcmp.ge.f32.partialorder %v445, %v469
  %vm471 = vcmp.ge.f32.partialorder %v460, %v469
  %v472 = vsel %vm470, -1.0, %v445
  %v473 = vsel %vm471, -1.0, %v460
  %v474 = vsel %vm87, %v472, -inf
  %v475 = vsel %vm87, %v473, -inf
  %v476 = vmax.f32 %v474, %v475
  %v477 = vrot.slane %v476, 4
  %v478 = vmax.f32 %v476, %v477
  %v479 = vrot.slane %v478, 2
  %v480 = vmax.f32 %v478, %v479
  %v481 = vrot.slane %v480, 1
  %v482 = vmax.f32 %v480, %v481
  %vm483 = vcmp.ge.f32.partialorder %v472, %v482
  %vm484 = vcmp.ge.f32.partialorder %v473, %v482
  %v485 = vsel %vm483, -1.0, %v472
  %v486 = vsel %vm484, -1.0, %v473
  %v487 = vsel %vm87, %v485, -inf
  %v488 = vsel %vm87, %v486, -inf
  %v489 = vmax.f32 %v487, %v488
  %v490 = vrot.slane %v489, 4
  %v491 = vmax.f32 %v489, %v490
  %v492 = vrot.slane %v491, 2
  %v493 = vmax.f32 %v491, %v492
  %v494 = vrot.slane %v493, 1
  %v495 = vmax.f32 %v493, %v494
  %vm496 = vcmp.ge.f32.partialorder %v485, %v495
  %vm497 = vcmp.ge.f32.partialorder %v486, %v495
  %v498 = vsel %vm496, -1.0, %v485
  %v499 = vsel %vm497, -1.0, %v486
  %v500 = vsel %vm87, %v498, -inf
  %v501 = vsel %vm87, %v499, -inf
  %v502 = vmax.f32 %v500, %v501
  %v503 = vrot.slane %v502, 4
  %v504 = vmax.f32 %v502, %v503
  %v505 = vrot.slane %v504, 2
  %v506 = vmax.f32 %v504, %v505
  %v507 = vrot.slane %v506, 1
  %v508 = vmax.f32 %v506, %v507
  %vm509 = vcmp.ge.f32.partialorder %v445, %v508
  %vm510 = vcmp.ge.f32.partialorder %v460, %v508
  %v511 = vsel %vm509, %v445, 0.0
  %v512 = vsel %vm510, %v460, 0.0
  %v513 = vunpack.c.l.bf16 %v47
  %v514 = vunpack.c.l.bf16 %v48
  %v515 = vmax.f32 %v513, %v511
  %v516 = vmax.f32 %v514, %v512
  %v517 = vpack.c.bf16 %v515, %v515
  %v518 = vpack.c.bf16 %v516, %v516
  %519 = vst.msk [vmem:[#allocation2 + $0x8] sm:$0xf] %vm51, %v517
  %520 = vst.msk [vmem:[#allocation2 + $0xc] sm:$0xf] %vm51, %v518
  %v521 = vpack.c.bf16 %v368, %v367
  %v522 = vld [vmem:[%s5] sm:$0xf]
  %v523 = vld [vmem:[%s5 + $0x4] sm:$0xf]
  %v524 = vld [vmem:[%s5 + $0x8] sm:$0xf]
  %v525 = vld [vmem:[%s5 + $0xc] sm:$0xf]
  %v530 = vunpack.c.l.b16 %v522
  %v531 = vunpack.c.l.b16 %v523
  %v532 = vunpack.c.l.b16 %v524
  %v533 = vunpack.c.l.b16 %v525
  %v534 = vpack.c.b16 %v531, %v530
  %v535 = vpack.c.b16 %v533, %v532
  %v539 = vsel %vm60, %v521, 0
  %541 = vmatpush.bf16.msra.mxu0 0
  %542 = vmatpush.bf16.msra.mxu0 0
  %543 = vmatpush.bf16.msra.mxu0 0
  %544 = vmatpush.bf16.msra.mxu0 0
  %545 = vmatpush.bf16.msra.mxu0 0
  %546 = vmatpush.bf16.msra.mxu0 0
  %547 = vmatpush.bf16.msra.mxu0 %v535
  %548 = vmatpush.bf16.msra.mxu0 %v534
  %549 = vmatmul.bf16.gmra.mxu0 %v539
  %v550 = vpop.f32.mrf.mxu0
  %v551 = vadd.f32 0.0, %v550
  %v552 = vpop.f32.mrf.mxu0
  %v553 = vadd.f32 0.0, %v552
  %554 = vdwg.mxu0
  %v555 = vpack.c.bf16 %v553, %v551
  %v557 = vsel %vm60, %v555, 0
  %559 = vmatpush.bf16.xpose.msra.mxu0 0
  %560 = vmatpush.bf16.xpose.msra.mxu0 0
  %561 = vmatpush.bf16.xpose.msra.mxu0 0
  %562 = vmatpush.bf16.xpose.msra.mxu0 0
  %563 = vmatpush.bf16.xpose.msra.mxu0 0
  %564 = vmatpush.bf16.xpose.msra.mxu0 0
  %565 = vmatpush.bf16.xpose.msra.mxu0 0
  %566 = vmatpush.bf16.xpose.msra.mxu0 %v539
  %567 = vmatmul.bf16.gmra.mxu0 %v557
  %v568 = vpop.f32.mrf.mxu0
  %v569 = vadd.f32 0.0, %v568
  %v570 = vpop.f32.mrf.mxu0
  %v571 = vadd.f32 0.0, %v570
  %572 = vdwg.mxu0
  %v573 = vmul.f32 %v569, 0.17677669
  %v574 = vmul.f32 %v571, 0.17677669
  %v575 = vxor.u32 %v573, 2147483648
  %v576 = vxor.u32 %v574, 2147483648
  %v577 = vmul.f32 %v575, 1.442695
  %v578 = vpow.pop %v577
  %v579 = vmul.f32 %v576, 1.442695
  %v580 = vpow.pop %v579
  %v581 = vadd.f32 %v578, 1.0
  %v582 = vadd.f32 %v580, 1.0
  %v583 = vrcp.pop %v581
  %v584 = vmul.f32 %v581, %v583
  %v585 = vsub.f32 1.0, %v584
  %v586 = vmul.f32 %v583, %v585
  %v587 = vadd.f32 %v583, %v586
  %vm588 = vweird.f32 %v581
  %vm589 = vweird.f32 %v583
  %vm590 = vmor %vm588, %vm589
  %v591 = vsel %vm590, %v583, %v587
  %v592 = vand.u32 2147483647, %v581
  %vm593 = vcmp.eq.f32.partialorder %v592, 8.507059e+37
  %v594 = vand.u32 %v581, 2147483648
  %v595 = vor.u32 1.1754944e-38, %v594
  %v596 = vsel %vm593, %v595, %v591
  %v597 = vmul.f32 1.0, %v596
  %v598 = vrcp.pop %v582
  %v599 = vmul.f32 %v582, %v598
  %v600 = vsub.f32 1.0, %v599
  %v601 = vmul.f32 %v598, %v600
  %v602 = vadd.f32 %v598, %v601
  %vm603 = vweird.f32 %v582
  %vm604 = vweird.f32 %v598
  %vm605 = vmor %vm603, %vm604
  %v606 = vsel %vm605, %v598, %v602
  %v607 = vand.u32 2147483647, %v582
  %vm608 = vcmp.eq.f32.partialorder %v607, 8.507059e+37
  %v609 = vand.u32 %v582, 2147483648
  %v610 = vor.u32 1.1754944e-38, %v609
  %v611 = vsel %vm608, %v610, %v606
  %v612 = vmul.f32 1.0, %v611
  %v613 = vsel %vm87, %v597, -inf
  %v614 = vsel %vm87, %v612, -inf
  %v615 = vmax.f32 %v613, %v614
  %v616 = vrot.slane %v615, 4
  %v617 = vmax.f32 %v615, %v616
  %v618 = vrot.slane %v617, 2
  %v619 = vmax.f32 %v617, %v618
  %v620 = vrot.slane %v619, 1
  %v621 = vmax.f32 %v619, %v620
  %vm622 = vcmp.ge.f32.partialorder %v597, %v621
  %vm623 = vcmp.ge.f32.partialorder %v612, %v621
  %v624 = vsel %vm622, -1.0, %v597
  %v625 = vsel %vm623, -1.0, %v612
  %v626 = vsel %vm87, %v624, -inf
  %v627 = vsel %vm87, %v625, -inf
  %v628 = vmax.f32 %v626, %v627
  %v629 = vrot.slane %v628, 4
  %v630 = vmax.f32 %v628, %v629
  %v631 = vrot.slane %v630, 2
  %v632 = vmax.f32 %v630, %v631
  %v633 = vrot.slane %v632, 1
  %v634 = vmax.f32 %v632, %v633
  %vm635 = vcmp.ge.f32.partialorder %v624, %v634
  %vm636 = vcmp.ge.f32.partialorder %v625, %v634
  %v637 = vsel %vm635, -1.0, %v624
  %v638 = vsel %vm636, -1.0, %v625
  %v639 = vsel %vm87, %v637, -inf
  %v640 = vsel %vm87, %v638, -inf
  %v641 = vmax.f32 %v639, %v640
  %v642 = vrot.slane %v641, 4
  %v643 = vmax.f32 %v641, %v642
  %v644 = vrot.slane %v643, 2
  %v645 = vmax.f32 %v643, %v644
  %v646 = vrot.slane %v645, 1
  %v647 = vmax.f32 %v645, %v646
  %vm648 = vcmp.ge.f32.partialorder %v637, %v647
  %vm649 = vcmp.ge.f32.partialorder %v638, %v647
  %v650 = vsel %vm648, -1.0, %v637
  %v651 = vsel %vm649, -1.0, %v638
  %v652 = vsel %vm87, %v650, -inf
  %v653 = vsel %vm87, %v651, -inf
  %v654 = vmax.f32 %v652, %v653
  %v655 = vrot.slane %v654, 4
  %v656 = vmax.f32 %v654, %v655
  %v657 = vrot.slane %v656, 2
  %v658 = vmax.f32 %v656, %v657
  %v659 = vrot.slane %v658, 1
  %v660 = vmax.f32 %v658, %v659
  %vm661 = vcmp.ge.f32.partialorder %v597, %v660
  %vm662 = vcmp.ge.f32.partialorder %v612, %v660
  %v663 = vsel %vm661, %v597, 0.0
  %v664 = vsel %vm662, %v612, 0.0
  %v665 = vunpack.c.l.bf16 %v49
  %v666 = vunpack.c.l.bf16 %v50
  %v667 = vmax.f32 %v665, %v663
  %v668 = vmax.f32 %v666, %v664
  %v669 = vpack.c.bf16 %v667, %v667
  %v670 = vpack.c.bf16 %v668, %v668
  %671 = vst.msk [vmem:[#allocation2 + $0x10] sm:$0xf] %vm51, %v669
  %672 = vst.msk [vmem:[#allocation2 + $0x14] sm:$0xf] %vm51, %v670
  %v673 = vld [vmem:[#allocation2] sm:$0xf]
  %v674 = vld [vmem:[#allocation2 + $0x4] sm:$0xf]
  %v675 = vld [vmem:[#allocation2 + $0x8] sm:$0xf]
  %v676 = vld [vmem:[#allocation2 + $0xc] sm:$0xf]
  %v677 = vld [vmem:[#allocation2 + $0x10] sm:$0xf]
  %v678 = vld [vmem:[#allocation2 + $0x14] sm:$0xf]
  %v685 = vunpack.c.l.b16 %v673
  %v686 = vunpack.c.l.b16 %v674
  %v687 = vunpack.c.l.b16 %v675
  %v688 = vunpack.c.l.b16 %v676
  %v689 = vunpack.c.l.b16 %v677
  %v690 = vunpack.c.l.b16 %v678
  %v691 = vpack.c.b16 %v686, %v685
  %v692 = vpack.c.b16 %v688, %v687
  %v693 = vpack.c.b16 %v690, %v689
  %v695 = vsel %vm87, %v691, 0
  %v698 = vsel %vm87, %v692, 0
  %v701 = vsel %vm87, %v693, 0
  %703 = vmatpush.bf16.msra.mxu0 0
  %704 = vmatpush.bf16.msra.mxu0 0
  %705 = vmatpush.bf16.msra.mxu0 0
  %706 = vmatpush.bf16.msra.mxu0 0
  %707 = vmatpush.bf16.msra.mxu0 0
  %708 = vmatpush.bf16.msra.mxu0 0
  %709 = vmatpush.bf16.msra.mxu0 0
  %710 = vmatpush.bf16.msra.mxu0 %v65
  %711 = vmatmul.bf16.gmra.mxu0 %v695
  %v712 = vpop.f32.mrf.mxu0
  %v713 = vadd.f32 0.0, %v712
  %v714 = vpop.f32.mrf.mxu0
  %v715 = vadd.f32 0.0, %v714
  %716 = vmatmul.bf16.gmra.mxu0 %v698
  %v717 = vpop.f32.mrf.mxu0
  %v718 = vadd.f32 0.0, %v717
  %v719 = vpop.f32.mrf.mxu0
  %v720 = vadd.f32 0.0, %v719
  %721 = vmatmul.bf16.gmra.mxu0 %v701
  %v722 = vpop.f32.mrf.mxu0
  %v723 = vadd.f32 0.0, %v722
  %v724 = vpop.f32.mrf.mxu0
  %v725 = vadd.f32 0.0, %v724
  %726 = vdwg.mxu0
  %v727 = vpack.c.bf16 %v715, %v713
  %v728 = vld [vmem:[%s6] sm:$0xf]
  %v729 = vld [vmem:[%s6 + $0x4] sm:$0xf]
  %v730 = vld [vmem:[%s6 + $0x8] sm:$0xf]
  %v731 = vld [vmem:[%s6 + $0xc] sm:$0xf]
  %v732 = vpack.c.bf16 %v720, %v718
  %s733 = scalar_lea.vmem %s6, 16
  %v734 = vld [vmem:[%s733] sm:$0xf]
  %v735 = vld [vmem:[%s733 + $0x4] sm:$0xf]
  %v736 = vld [vmem:[%s733 + $0x8] sm:$0xf]
  %v737 = vld [vmem:[%s733 + $0xc] sm:$0xf]
  %v742 = vunpack.c.l.b16 %v734
  %v743 = vunpack.c.l.b16 %v735
  %v744 = vunpack.c.l.b16 %v736
  %v745 = vunpack.c.l.b16 %v737
  %v746 = vpack.c.b16 %v743, %v742
  %v747 = vpack.c.b16 %v745, %v744
  %v751 = vsel %vm60, %v732, 0
  %753 = vmatpush.bf16.msra.mxu0 0
  %754 = vmatpush.bf16.msra.mxu0 0
  %755 = vmatpush.bf16.msra.mxu0 0
  %756 = vmatpush.bf16.msra.mxu0 0
  %757 = vmatpush.bf16.msra.mxu0 0
  %758 = vmatpush.bf16.msra.mxu0 0
  %759 = vmatpush.bf16.msra.mxu0 %v747
  %760 = vmatpush.bf16.msra.mxu0 %v746
  %761 = vmatmul.bf16.gmra.mxu0 %v751
  %v762 = vpop.f32.mrf.mxu0
  %v763 = vadd.f32 0.0, %v762
  %v764 = vpop.f32.mrf.mxu0
  %v765 = vadd.f32 0.0, %v764
  %766 = vdwg.mxu0
  %v771 = vunpack.c.l.b16 %v728
  %v772 = vunpack.c.l.b16 %v729
  %v773 = vunpack.c.l.b16 %v730
  %v774 = vunpack.c.l.b16 %v731
  %v775 = vpack.c.b16 %v772, %v771
  %v776 = vpack.c.b16 %v774, %v773
  %v780 = vsel %vm60, %v727, 0
  %782 = vmatpush.bf16.msra.mxu0 0
  %783 = vmatpush.bf16.msra.mxu0 0
  %784 = vmatpush.bf16.msra.mxu0 0
  %785 = vmatpush.bf16.msra.mxu0 0
  %786 = vmatpush.bf16.msra.mxu0 0
  %787 = vmatpush.bf16.msra.mxu0 0
  %788 = vmatpush.bf16.msra.mxu0 %v776
  %789 = vmatpush.bf16.msra.mxu0 %v775
  %790 = vmatmul.bf16.gmra.mxu0 %v780
  %v791 = vpop.f32.mrf.mxu0
  %v792 = vadd.f32 %v763, %v791
  %v793 = vpop.f32.mrf.mxu0
  %v794 = vadd.f32 %v765, %v793
  %795 = vdwg.mxu0
  %v796 = vpack.c.bf16 %v725, %v723
  %s797 = scalar_lea.vmem %s6, 32
  %v798 = vld [vmem:[%s797] sm:$0xf]
  %v799 = vld [vmem:[%s797 + $0x4] sm:$0xf]
  %v800 = vld [vmem:[%s797 + $0x8] sm:$0xf]
  %v801 = vld [vmem:[%s797 + $0xc] sm:$0xf]
  %v806 = vunpack.c.l.b16 %v798
  %v807 = vunpack.c.l.b16 %v799
  %v808 = vunpack.c.l.b16 %v800
  %v809 = vunpack.c.l.b16 %v801
  %v810 = vpack.c.b16 %v807, %v806
  %v811 = vpack.c.b16 %v809, %v808
  %v815 = vsel %vm60, %v796, 0
  %817 = vmatpush.bf16.msra.mxu0 0
  %818 = vmatpush.bf16.msra.mxu0 0
  %819 = vmatpush.bf16.msra.mxu0 0
  %820 = vmatpush.bf16.msra.mxu0 0
  %821 = vmatpush.bf16.msra.mxu0 0
  %822 = vmatpush.bf16.msra.mxu0 0
  %823 = vmatpush.bf16.msra.mxu0 %v811
  %824 = vmatpush.bf16.msra.mxu0 %v810
  %825 = vmatmul.bf16.gmra.mxu0 %v815
  %v826 = vpop.f32.mrf.mxu0
  %v827 = vadd.f32 0.0, %v826
  %v828 = vpop.f32.mrf.mxu0
  %v829 = vadd.f32 0.0, %v828
  %830 = vdwg.mxu0
  %v831 = vadd.f32 %v792, %v827
  %v832 = vadd.f32 %v794, %v829
  %v833 = vld [vmem:[%s7] sm:$0x1]
  %v835 = vperm.slane %v833, 0
  %v837 = vadd.f32 %v831, %v835
  %v838 = vadd.f32 %v832, %v835
  %v839 = vmax.f32 %v837, 0.0
  %v840 = vmax.f32 %v838, 0.0
  %841 = vst.msk [vmem:[#allocation3] sm:$0xff] %vm60, %v839
  %842 = vst.msk [vmem:[#allocation3 + $0x8] sm:$0xff] %vm60, %v840
  %v843 = vpack.c.bf16 %v206, %v205
  %v844 = vld [vmem:[%s2] sm:$0xf]
  %v845 = vld [vmem:[%s2 + $0x4] sm:$0xf]
  %v848 = vunpack.c.l.b16 %v844
  %v849 = vunpack.c.l.b16 %v845
  %v850 = vpack.c.b16 %v849, %v848
  %vm851 = vcmask 392192
  %v853 = vsel %vm851, %v850, 0
  %855 = vmatpush.bf16.msra.mxu0 0
  %856 = vmatpush.bf16.msra.mxu0 0
  %857 = vmatpush.bf16.msra.mxu0 0
  %858 = vmatpush.bf16.msra.mxu0 0
  %859 = vmatpush.bf16.msra.mxu0 0
  %860 = vmatpush.bf16.msra.mxu0 %v521
  %861 = vmatpush.bf16.msra.mxu0 %v369
  %862 = vmatpush.bf16.msra.mxu0 %v843
  %863 = vmatmul.bf16.gmra.mxu0 %v853
  %v864 = vpop.f32.mrf.mxu0
  %v865 = vadd.f32 0.0, %v864
  %v866 = vpop.f32.mrf.mxu0
  %v867 = vadd.f32 0.0, %v866
  %868 = vdwg.mxu0
  %871 = vrot.lane.b32.xlu0 %v865, 32
  %v872 = vpop.permute.xlu0 %871
  %873 = vrot.lane.b32.xlu0 %v867, 32
  %v874 = vpop.permute.xlu0 %873
  %vm877 = vcmask 523520
  %878 = vst.msk [vmem:[#allocation3] sm:$0xff] %vm877, %v872
  %879 = vst.msk [vmem:[#allocation3 + $0x8] sm:$0xff] %vm877, %v874
  %s880 = scalar_lea.vmem %s2, 8
  %v881 = vld [vmem:[%s880] sm:$0xf]
  %v882 = vld [vmem:[%s880 + $0x4] sm:$0xf]
  %v885 = vunpack.c.l.b16 %v881
  %v886 = vunpack.c.l.b16 %v882
  %v887 = vpack.c.b16 %v886, %v885
  %v889 = vsel %vm851, %v887, 0
  %891 = vmatpush.bf16.msra.mxu0 0
  %892 = vmatpush.bf16.msra.mxu0 0
  %893 = vmatpush.bf16.msra.mxu0 0
  %894 = vmatpush.bf16.msra.mxu0 0
  %895 = vmatpush.bf16.msra.mxu0 0
  %896 = vmatpush.bf16.msra.mxu0 %v521
  %897 = vmatpush.bf16.msra.mxu0 %v369
  %898 = vmatpush.bf16.msra.mxu0 %v843
  %899 = vmatmul.bf16.gmra.mxu0 %v889
  %v900 = vpop.f32.mrf.mxu0
  %v901 = vadd.f32 0.0, %v900
  %v902 = vpop.f32.mrf.mxu0
  %v903 = vadd.f32 0.0, %v902
  %904 = vdwg.mxu0
  %907 = vrot.lane.b32.xlu0 %v901, 64
  %v908 = vpop.permute.xlu0 %907
  %909 = vrot.lane.b32.xlu0 %v903, 64
  %v910 = vpop.permute.xlu0 %909
  %vm913 = vcmask 785920
  %914 = vst.msk [vmem:[#allocation3] sm:$0xff] %vm913, %v908
  %915 = vst.msk [vmem:[#allocation3 + $0x8] sm:$0xff] %vm913, %v910
  %s916 = scalar_lea.vmem %s2, 16
  %v917 = vld [vmem:[%s916] sm:$0xf]
  %v918 = vld [vmem:[%s916 + $0x4] sm:$0xf]
  %v921 = vunpack.c.l.b16 %v917
  %v922 = vunpack.c.l.b16 %v918
  %v923 = vpack.c.b16 %v922, %v921
  %v925 = vsel %vm851, %v923, 0
  %927 = vmatpush.bf16.msra.mxu0 0
  %928 = vmatpush.bf16.msra.mxu0 0
  %929 = vmatpush.bf16.msra.mxu0 0
  %930 = vmatpush.bf16.msra.mxu0 0
  %931 = vmatpush.bf16.msra.mxu0 0
  %932 = vmatpush.bf16.msra.mxu0 %v521
  %933 = vmatpush.bf16.msra.mxu0 %v369
  %934 = vmatpush.bf16.msra.mxu0 %v843
  %935 = vmatmul.bf16.gmra.mxu0 %v925
  %v936 = vpop.f32.mrf.mxu0
  %v937 = vadd.f32 0.0, %v936
  %v938 = vpop.f32.mrf.mxu0
  %v939 = vadd.f32 0.0, %v938
  %940 = vdwg.mxu0
  %943 = vrot.lane.b32.xlu0 %v937, 96
  %v944 = vpop.permute.xlu0 %943
  %945 = vrot.lane.b32.xlu0 %v939, 96
  %v946 = vpop.permute.xlu0 %945
  %vm949 = vcmask 1048320
  %950 = vst.msk [vmem:[#allocation3] sm:$0xff] %vm949, %v944
  %951 = vst.msk [vmem:[#allocation3 + $0x8] sm:$0xff] %vm949, %v946
  %v952 = vld [vmem:[#allocation3] sm:$0xff]
  %v953 = vld [vmem:[#allocation3 + $0x8] sm:$0xff]
  %v954 = vpack.c.bf16 %v952, %v952
  %v955 = vpack.c.bf16 %v953, %v953
  %v956 = vld [vmem:[#allocation2] sm:$0xf]
  %v957 = vld [vmem:[#allocation2 + $0x4] sm:$0xf]
  %v958 = vld [vmem:[#allocation2 + $0x8] sm:$0xf]
  %v959 = vld [vmem:[#allocation2 + $0xc] sm:$0xf]
  %v960 = vld [vmem:[#allocation2 + $0x10] sm:$0xf]
  %v961 = vld [vmem:[#allocation2 + $0x14] sm:$0xf]
  %v968 = vunpack.c.l.b16 %v956
  %v969 = vunpack.c.l.b16 %v957
  %v970 = vunpack.c.l.b16 %v958
  %v971 = vunpack.c.l.b16 %v959
  %v972 = vunpack.c.l.b16 %v960
  %v973 = vunpack.c.l.b16 %v961
  %v974 = vpack.c.b16 %v969, %v968
  %v975 = vpack.c.b16 %v971, %v970
  %v976 = vpack.c.b16 %v973, %v972
  %v979 = vunpack.c.l.b16 %v954
  %v980 = vunpack.c.l.b16 %v955
  %v981 = vpack.c.b16 %v980, %v979
  %v984 = vsel %vm87, %v974, 0
  %v987 = vsel %vm87, %v975, 0
  %v990 = vsel %vm87, %v976, 0
  %992 = vmatpush.bf16.msra.mxu0 0
  %993 = vmatpush.bf16.msra.mxu0 0
  %994 = vmatpush.bf16.msra.mxu0 0
  %995 = vmatpush.bf16.msra.mxu0 0
  %996 = vmatpush.bf16.msra.mxu0 0
  %997 = vmatpush.bf16.msra.mxu0 0
  %998 = vmatpush.bf16.msra.mxu0 0
  %999 = vmatpush.bf16.msra.mxu0 %v981
  %1000 = vmatmul.bf16.gmra.mxu0 %v984
  %v1001 = vpop.f32.mrf.mxu0
  %v1002 = vpop.f32.mrf.mxu0
  %1003 = vmatmul.bf16.gmra.mxu0 %v987
  %v1004 = vpop.f32.mrf.mxu0
  %v1005 = vadd.f32 0.0, %v1004
  %v1006 = vpop.f32.mrf.mxu0
  %v1007 = vadd.f32 0.0, %v1006
  %1008 = vmatmul.bf16.gmra.mxu0 %v990
  %v1009 = vpop.f32.mrf.mxu0
  %v1010 = vadd.f32 0.0, %v1009
  %v1011 = vpop.f32.mrf.mxu0
  %v1012 = vadd.f32 0.0, %v1011
  %1013 = vdwg.mxu0
  %v1014 = vpack.c.bf16 %v1007, %v1005
  %s1015 = scalar_lea.vmem %s8, 64
  %v1016 = vld [vmem:[%s1015] sm:$0xf]
  %v1017 = vld [vmem:[%s1015 + $0x4] sm:$0xf]
  %v1018 = vld [vmem:[%s1015 + $0x8] sm:$0xf]
  %v1019 = vld [vmem:[%s1015 + $0xc] sm:$0xf]
  %v1020 = vld [vmem:[%s1015 + $0x10] sm:$0xf]
  %v1021 = vld [vmem:[%s1015 + $0x14] sm:$0xf]
  %v1022 = vld [vmem:[%s1015 + $0x18] sm:$0xf]
  %v1023 = vld [vmem:[%s1015 + $0x1c] sm:$0xf]
  %v1024 = vld [vmem:[%s1015 + $0x20] sm:$0xf]
  %v1025 = vld [vmem:[%s1015 + $0x24] sm:$0xf]
  %v1026 = vld [vmem:[%s1015 + $0x28] sm:$0xf]
  %v1027 = vld [vmem:[%s1015 + $0x2c] sm:$0xf]
  %v1028 = vld [vmem:[%s1015 + $0x30] sm:$0xf]
  %v1029 = vld [vmem:[%s1015 + $0x34] sm:$0xf]
  %v1030 = vld [vmem:[%s1015 + $0x38] sm:$0xf]
  %v1031 = vld [vmem:[%s1015 + $0x3c] sm:$0xf]
  %s1032 = scalar_lea.vmem %s9, 1
  %v1033 = vld [vmem:[%s1032] sm:$0x1]
  %v1035 = vperm.slane %v1033, 0
  %v1053 = vunpack.c.l.b16 %v1016
  %v1054 = vunpack.c.l.b16 %v1017
  %v1055 = vunpack.c.l.b16 %v1018
  %v1056 = vunpack.c.l.b16 %v1019
  %v1057 = vunpack.c.l.b16 %v1020
  %v1058 = vunpack.c.l.b16 %v1021
  %v1059 = vunpack.c.l.b16 %v1022
  %v1060 = vunpack.c.l.b16 %v1023
  %v1061 = vunpack.c.l.b16 %v1024
  %v1062 = vunpack.c.l.b16 %v1025
  %v1063 = vunpack.c.l.b16 %v1026
  %v1064 = vunpack.c.l.b16 %v1027
  %v1065 = vunpack.c.l.b16 %v1028
  %v1066 = vunpack.c.l.b16 %v1029
  %v1067 = vunpack.c.l.b16 %v1030
  %v1068 = vunpack.c.l.b16 %v1031
  %v1069 = vpack.c.b16 %v1054, %v1053
  %v1070 = vpack.c.b16 %v1056, %v1055
  %v1071 = vpack.c.b16 %v1058, %v1057
  %v1072 = vpack.c.b16 %v1060, %v1059
  %v1073 = vpack.c.b16 %v1062, %v1061
  %v1074 = vpack.c.b16 %v1064, %v1063
  %v1075 = vpack.c.b16 %v1066, %v1065
  %v1076 = vpack.c.b16 %v1068, %v1067
  %1085 = vmatpush.bf16.msra.mxu0 %v1076
  %1086 = vmatpush.bf16.msra.mxu0 %v1075
  %1087 = vmatpush.bf16.msra.mxu0 %v1074
  %1088 = vmatpush.bf16.msra.mxu0 %v1073
  %1089 = vmatpush.bf16.msra.mxu0 %v1072
  %1090 = vmatpush.bf16.msra.mxu0 %v1071
  %1091 = vmatpush.bf16.msra.mxu0 %v1070
  %1092 = vmatpush.bf16.msra.mxu0 %v1069
  %1093 = vmatmul.bf16.gmra.mxu0 %v1014
  %v1094 = vpop.f32.mrf.mxu0
  %v1095 = vadd.f32 %v1035, %v1094
  %v1096 = vpop.f32.mrf.mxu0
  %v1097 = vadd.f32 %v1035, %v1096
  %1098 = vdwg.mxu0
  %v1099 = vsel %vm60, %v1095, 0.0
  %v1100 = vsel %vm60, %v1097, 0.0
  %v1101 = vadd.f32 %v1099, %v1100
  %v1102 = vrot.slane %v1101, 4
  %v1103 = vadd.f32 %v1101, %v1102
  %v1104 = vrot.slane %v1103, 2
  %v1105 = vadd.f32 %v1103, %v1104
  %v1106 = vrot.slane %v1105, 1
  %v1107 = vadd.f32 %v1105, %v1106
  %v1108 = vmul.f32 %v1107, %v174
  %v1109 = vmul.f32 %v1095, %v1095
  %v1110 = vmul.f32 %v1097, %v1097
  %v1111 = vsel %vm60, %v1109, 0.0
  %v1112 = vsel %vm60, %v1110, 0.0
  %v1113 = vadd.f32 %v1111, %v1112
  %v1114 = vrot.slane %v1113, 4
  %v1115 = vadd.f32 %v1113, %v1114
  %v1116 = vrot.slane %v1115, 2
  %v1117 = vadd.f32 %v1115, %v1116
  %v1118 = vrot.slane %v1117, 1
  %v1119 = vadd.f32 %v1117, %v1118
  %v1120 = vmul.f32 %v1119, %v174
  %v1121 = vsub.f32 %v1095, %v1108
  %v1122 = vsub.f32 %v1097, %v1108
  %v1123 = vmul.f32 %v1108, %v1108
  %v1124 = vsub.f32 %v1120, %v1123
  %v1125 = vadd.f32 %v1124, 1e-05
  %v1126 = vrsqrt.pop %v1125
  %v1127 = vmul.f32 %v1126, %v1125
  %v1128 = vmul.f32 %v1127, %v1126
  %v1129 = vmul.f32 0.5, %v1128
  %v1130 = vsub.f32 1.5, %v1129
  %v1131 = vmul.f32 %v1126, %v1130
  %vm1132 = vweird.f32 %v1125
  %vm1133 = vweird.f32 %v1126
  %vm1134 = vmor %vm1132, %vm1133
  %v1135 = vsel %vm1134, %v1126, %v1131
  %v1136 = vmul.f32 %v1121, %v1135
  %v1137 = vmul.f32 %v1122, %v1135
  %v1138 = vmax.f32 %v1136, 0.0
  %v1139 = vmax.f32 %v1137, 0.0
  %v1140 = vpack.c.bf16 %v1012, %v1010
  %s1141 = scalar_lea.vmem %s8, 128
  %v1142 = vld [vmem:[%s1141] sm:$0xf]
  %v1143 = vld [vmem:[%s1141 + $0x4] sm:$0xf]
  %v1144 = vld [vmem:[%s1141 + $0x8] sm:$0xf]
  %v1145 = vld [vmem:[%s1141 + $0xc] sm:$0xf]
  %v1146 = vld [vmem:[%s1141 + $0x10] sm:$0xf]
  %v1147 = vld [vmem:[%s1141 + $0x14] sm:$0xf]
  %v1148 = vld [vmem:[%s1141 + $0x18] sm:$0xf]
  %v1149 = vld [vmem:[%s1141 + $0x1c] sm:$0xf]
  %v1150 = vld [vmem:[%s1141 + $0x20] sm:$0xf]
  %v1151 = vld [vmem:[%s1141 + $0x24] sm:$0xf]
  %v1152 = vld [vmem:[%s1141 + $0x28] sm:$0xf]
  %v1153 = vld [vmem:[%s1141 + $0x2c] sm:$0xf]
  %v1154 = vld [vmem:[%s1141 + $0x30] sm:$0xf]
  %v1155 = vld [vmem:[%s1141 + $0x34] sm:$0xf]
  %v1156 = vld [vmem:[%s1141 + $0x38] sm:$0xf]
  %v1157 = vld [vmem:[%s1141 + $0x3c] sm:$0xf]
  %s1158 = scalar_lea.vmem %s9, 2
  %v1159 = vld [vmem:[%s1158] sm:$0x1]
  %v1161 = vperm.slane %v1159, 0
  %v1179 = vunpack.c.l.b16 %v1142
  %v1180 = vunpack.c.l.b16 %v1143
  %v1181 = vunpack.c.l.b16 %v1144
  %v1182 = vunpack.c.l.b16 %v1145
  %v1183 = vunpack.c.l.b16 %v1146
  %v1184 = vunpack.c.l.b16 %v1147
  %v1185 = vunpack.c.l.b16 %v1148
  %v1186 = vunpack.c.l.b16 %v1149
  %v1187 = vunpack.c.l.b16 %v1150
  %v1188 = vunpack.c.l.b16 %v1151
  %v1189 = vunpack.c.l.b16 %v1152
  %v1190 = vunpack.c.l.b16 %v1153
  %v1191 = vunpack.c.l.b16 %v1154
  %v1192 = vunpack.c.l.b16 %v1155
  %v1193 = vunpack.c.l.b16 %v1156
  %v1194 = vunpack.c.l.b16 %v1157
  %v1195 = vpack.c.b16 %v1180, %v1179
  %v1196 = vpack.c.b16 %v1182, %v1181
  %v1197 = vpack.c.b16 %v1184, %v1183
  %v1198 = vpack.c.b16 %v1186, %v1185
  %v1199 = vpack.c.b16 %v1188, %v1187
  %v1200 = vpack.c.b16 %v1190, %v1189
  %v1201 = vpack.c.b16 %v1192, %v1191
  %v1202 = vpack.c.b16 %v1194, %v1193
  %1211 = vmatpush.bf16.msra.mxu0 %v1202
  %1212 = vmatpush.bf16.msra.mxu0 %v1201
  %1213 = vmatpush.bf16.msra.mxu0 %v1200
  %1214 = vmatpush.bf16.msra.mxu0 %v1199
  %1215 = vmatpush.bf16.msra.mxu0 %v1198
  %1216 = vmatpush.bf16.msra.mxu0 %v1197
  %1217 = vmatpush.bf16.msra.mxu0 %v1196
  %1218 = vmatpush.bf16.msra.mxu0 %v1195
  %1219 = vmatmul.bf16.gmra.mxu0 %v1140
  %v1220 = vpop.f32.mrf.mxu0
  %v1221 = vadd.f32 %v1161, %v1220
  %v1222 = vpop.f32.mrf.mxu0
  %v1223 = vadd.f32 %v1161, %v1222
  %1224 = vdwg.mxu0
  %v1225 = vsel %vm60, %v1221, 0.0
  %v1226 = vsel %vm60, %v1223, 0.0
  %v1227 = vadd.f32 %v1225, %v1226
  %v1228 = vrot.slane %v1227, 4
  %v1229 = vadd.f32 %v1227, %v1228
  %v1230 = vrot.slane %v1229, 2
  %v1231 = vadd.f32 %v1229, %v1230
  %v1232 = vrot.slane %v1231, 1
  %v1233 = vadd.f32 %v1231, %v1232
  %v1234 = vmul.f32 %v1233, %v174
  %v1235 = vmul.f32 %v1221, %v1221
  %v1236 = vmul.f32 %v1223, %v1223
  %v1237 = vsel %vm60, %v1235, 0.0
  %v1238 = vsel %vm60, %v1236, 0.0
  %v1239 = vadd.f32 %v1237, %v1238
  %v1240 = vrot.slane %v1239, 4
  %v1241 = vadd.f32 %v1239, %v1240
  %v1242 = vrot.slane %v1241, 2
  %v1243 = vadd.f32 %v1241, %v1242
  %v1244 = vrot.slane %v1243, 1
  %v1245 = vadd.f32 %v1243, %v1244
  %v1246 = vmul.f32 %v1245, %v174
  %v1247 = vsub.f32 %v1221, %v1234
  %v1248 = vsub.f32 %v1223, %v1234
  %v1249 = vmul.f32 %v1234, %v1234
  %v1250 = vsub.f32 %v1246, %v1249
  %v1251 = vadd.f32 %v1250, 1e-05
  %v1252 = vrsqrt.pop %v1251
  %v1253 = vmul.f32 %v1252, %v1251
  %v1254 = vmul.f32 %v1253, %v1252
  %v1255 = vmul.f32 0.5, %v1254
  %v1256 = vsub.f32 1.5, %v1255
  %v1257 = vmul.f32 %v1252, %v1256
  %vm1258 = vweird.f32 %v1251
  %vm1259 = vweird.f32 %v1252
  %vm1260 = vmor %vm1258, %vm1259
  %v1261 = vsel %vm1260, %v1252, %v1257
  %v1262 = vmul.f32 %v1247, %v1261
  %v1263 = vmul.f32 %v1248, %v1261
  %v1264 = vmax.f32 %v1262, 0.0
  %v1265 = vmax.f32 %v1263, 0.0
  %v1266 = vpack.c.bf16 %v1139, %v1138
  %v1267 = vld [vmem:[%s10] sm:$0xf]
  %v1268 = vld [vmem:[%s10 + $0x4] sm:$0xf]
  %v1269 = vld [vmem:[%s10 + $0x8] sm:$0xf]
  %v1270 = vld [vmem:[%s10 + $0xc] sm:$0xf]
  %v1275 = vunpack.c.l.b16 %v1267
  %v1276 = vunpack.c.l.b16 %v1268
  %v1277 = vunpack.c.l.b16 %v1269
  %v1278 = vunpack.c.l.b16 %v1270
  %v1279 = vpack.c.b16 %v1276, %v1275
  %v1280 = vpack.c.b16 %v1278, %v1277
  %v1284 = vsel %vm60, %v1266, 0
  %1286 = vmatpush.bf16.msra.mxu0 0
  %1287 = vmatpush.bf16.msra.mxu0 0
  %1288 = vmatpush.bf16.msra.mxu0 0
  %1289 = vmatpush.bf16.msra.mxu0 0
  %1290 = vmatpush.bf16.msra.mxu0 0
  %1291 = vmatpush.bf16.msra.mxu0 0
  %1292 = vmatpush.bf16.msra.mxu0 %v1280
  %1293 = vmatpush.bf16.msra.mxu0 %v1279
  %1294 = vmatmul.bf16.gmra.mxu0 %v1284
  %v1295 = vpop.f32.mrf.mxu0
  %v1296 = vadd.f32 0.0, %v1295
  %v1297 = vpop.f32.mrf.mxu0
  %v1298 = vadd.f32 0.0, %v1297
  %1299 = vdwg.mxu0
  %v1300 = vpack.c.bf16 %v1298, %v1296
  %v1302 = vsel %vm60, %v1300, 0
  %1304 = vmatpush.bf16.xpose.msra.mxu0 0
  %1305 = vmatpush.bf16.xpose.msra.mxu0 0
  %1306 = vmatpush.bf16.xpose.msra.mxu0 0
  %1307 = vmatpush.bf16.xpose.msra.mxu0 0
  %1308 = vmatpush.bf16.xpose.msra.mxu0 0
  %1309 = vmatpush.bf16.xpose.msra.mxu0 0
  %1310 = vmatpush.bf16.xpose.msra.mxu0 0
  %1311 = vmatpush.bf16.xpose.msra.mxu0 %v1284
  %1312 = vmatmul.bf16.gmra.mxu0 %v1302
  %v1313 = vpop.f32.mrf.mxu0
  %v1314 = vadd.f32 0.0, %v1313
  %v1315 = vpop.f32.mrf.mxu0
  %v1316 = vadd.f32 0.0, %v1315
  %1317 = vdwg.mxu0
  %v1318 = vmul.f32 %v1314, 0.17677669
  %v1319 = vmul.f32 %v1316, 0.17677669
  %v1320 = vxor.u32 %v1318, 2147483648
  %v1321 = vxor.u32 %v1319, 2147483648
  %v1322 = vmul.f32 %v1320, 1.442695
  %v1323 = vpow.pop %v1322
  %v1324 = vmul.f32 %v1321, 1.442695
  %v1325 = vpow.pop %v1324
  %v1326 = vadd.f32 %v1323, 1.0
  %v1327 = vadd.f32 %v1325, 1.0
  %v1328 = vrcp.pop %v1326
  %v1329 = vmul.f32 %v1326, %v1328
  %v1330 = vsub.f32 1.0, %v1329
  %v1331 = vmul.f32 %v1328, %v1330
  %v1332 = vadd.f32 %v1328, %v1331
  %vm1333 = vweird.f32 %v1326
  %vm1334 = vweird.f32 %v1328
  %vm1335 = vmor %vm1333, %vm1334
  %v1336 = vsel %vm1335, %v1328, %v1332
  %v1337 = vand.u32 2147483647, %v1326
  %vm1338 = vcmp.eq.f32.partialorder %v1337, 8.507059e+37
  %v1339 = vand.u32 %v1326, 2147483648
  %v1340 = vor.u32 1.1754944e-38, %v1339
  %v1341 = vsel %vm1338, %v1340, %v1336
  %v1342 = vmul.f32 1.0, %v1341
  %v1343 = vrcp.pop %v1327
  %v1344 = vmul.f32 %v1327, %v1343
  %v1345 = vsub.f32 1.0, %v1344
  %v1346 = vmul.f32 %v1343, %v1345
  %v1347 = vadd.f32 %v1343, %v1346
  %vm1348 = vweird.f32 %v1327
  %vm1349 = vweird.f32 %v1343
  %vm1350 = vmor %vm1348, %vm1349
  %v1351 = vsel %vm1350, %v1343, %v1347
  %v1352 = vand.u32 2147483647, %v1327
  %vm1353 = vcmp.eq.f32.partialorder %v1352, 8.507059e+37
  %v1354 = vand.u32 %v1327, 2147483648
  %v1355 = vor.u32 1.1754944e-38, %v1354
  %v1356 = vsel %vm1353, %v1355, %v1351
  %v1357 = vmul.f32 1.0, %v1356
  %v1358 = vsel %vm87, %v1342, -inf
  %v1359 = vsel %vm87, %v1357, -inf
  %v1360 = vmax.f32 %v1358, %v1359
  %v1361 = vrot.slane %v1360, 4
  %v1362 = vmax.f32 %v1360, %v1361
  %v1363 = vrot.slane %v1362, 2
  %v1364 = vmax.f32 %v1362, %v1363
  %v1365 = vrot.slane %v1364, 1
  %v1366 = vmax.f32 %v1364, %v1365
  %vm1367 = vcmp.ge.f32.partialorder %v1342, %v1366
  %vm1368 = vcmp.ge.f32.partialorder %v1357, %v1366
  %v1369 = vsel %vm1367, -1.0, %v1342
  %v1370 = vsel %vm1368, -1.0, %v1357
  %v1371 = vsel %vm87, %v1369, -inf
  %v1372 = vsel %vm87, %v1370, -inf
  %v1373 = vmax.f32 %v1371, %v1372
  %v1374 = vrot.slane %v1373, 4
  %v1375 = vmax.f32 %v1373, %v1374
  %v1376 = vrot.slane %v1375, 2
  %v1377 = vmax.f32 %v1375, %v1376
  %v1378 = vrot.slane %v1377, 1
  %v1379 = vmax.f32 %v1377, %v1378
  %vm1380 = vcmp.ge.f32.partialorder %v1369, %v1379
  %vm1381 = vcmp.ge.f32.partialorder %v1370, %v1379
  %v1382 = vsel %vm1380, -1.0, %v1369
  %v1383 = vsel %vm1381, -1.0, %v1370
  %v1384 = vsel %vm87, %v1382, -inf
  %v1385 = vsel %vm87, %v1383, -inf
  %v1386 = vmax.f32 %v1384, %v1385
  %v1387 = vrot.slane %v1386, 4
  %v1388 = vmax.f32 %v1386, %v1387
  %v1389 = vrot.slane %v1388, 2
  %v1390 = vmax.f32 %v1388, %v1389
  %v1391 = vrot.slane %v1390, 1
  %v1392 = vmax.f32 %v1390, %v1391
  %vm1393 = vcmp.ge.f32.partialorder %v1382, %v1392
  %vm1394 = vcmp.ge.f32.partialorder %v1383, %v1392
  %v1395 = vsel %vm1393, -1.0, %v1382
  %v1396 = vsel %vm1394, -1.0, %v1383
  %v1397 = vsel %vm87, %v1395, -inf
  %v1398 = vsel %vm87, %v1396, -inf
  %v1399 = vmax.f32 %v1397, %v1398
  %v1400 = vrot.slane %v1399, 4
  %v1401 = vmax.f32 %v1399, %v1400
  %v1402 = vrot.slane %v1401, 2
  %v1403 = vmax.f32 %v1401, %v1402
  %v1404 = vrot.slane %v1403, 1
  %v1405 = vmax.f32 %v1403, %v1404
  %vm1406 = vcmp.ge.f32.partialorder %v1342, %v1405
  %vm1407 = vcmp.ge.f32.partialorder %v1357, %v1405
  %v1408 = vsel %vm1406, %v1342, 0.0
  %v1409 = vsel %vm1407, %v1357, 0.0
  %v1410 = vmax.f32 %v513, %v1408
  %v1411 = vmax.f32 %v514, %v1409
  %v1412 = vpack.c.bf16 %v1410, %v1410
  %v1413 = vpack.c.bf16 %v1411, %v1411
  %1414 = vst.msk [vmem:[#allocation2 + $0x8] sm:$0xf] %vm51, %v1412
  %1415 = vst.msk [vmem:[#allocation2 + $0xc] sm:$0xf] %vm51, %v1413
  %v1416 = vpack.c.bf16 %v1265, %v1264
  %v1417 = vld [vmem:[%s10] sm:$0xf]
  %v1418 = vld [vmem:[%s10 + $0x4] sm:$0xf]
  %v1419 = vld [vmem:[%s10 + $0x8] sm:$0xf]
  %v1420 = vld [vmem:[%s10 + $0xc] sm:$0xf]
  %v1425 = vunpack.c.l.b16 %v1417
  %v1426 = vunpack.c.l.b16 %v1418
  %v1427 = vunpack.c.l.b16 %v1419
  %v1428 = vunpack.c.l.b16 %v1420
  %v1429 = vpack.c.b16 %v1426, %v1425
  %v1430 = vpack.c.b16 %v1428, %v1427
  %v1434 = vsel %vm60, %v1416, 0
  %1436 = vmatpush.bf16.msra.mxu0 0
  %1437 = vmatpush.bf16.msra.mxu0 0
  %1438 = vmatpush.bf16.msra.mxu0 0
  %1439 = vmatpush.bf16.msra.mxu0 0
  %1440 = vmatpush.bf16.msra.mxu0 0
  %1441 = vmatpush.bf16.msra.mxu0 0
  %1442 = vmatpush.bf16.msra.mxu0 %v1430
  %1443 = vmatpush.bf16.msra.mxu0 %v1429
  %1444 = vmatmul.bf16.gmra.mxu0 %v1434
  %v1445 = vpop.f32.mrf.mxu0
  %v1446 = vadd.f32 0.0, %v1445
  %v1447 = vpop.f32.mrf.mxu0
  %v1448 = vadd.f32 0.0, %v1447
  %1449 = vdwg.mxu0
  %v1450 = vpack.c.bf16 %v1448, %v1446
  %v1452 = vsel %vm60, %v1450, 0
  %1454 = vmatpush.bf16.xpose.msra.mxu0 0
  %1455 = vmatpush.bf16.xpose.msra.mxu0 0
  %1456 = vmatpush.bf16.xpose.msra.mxu0 0
  %1457 = vmatpush.bf16.xpose.msra.mxu0 0
  %1458 = vmatpush.bf16.xpose.msra.mxu0 0
  %1459 = vmatpush.bf16.xpose.msra.mxu0 0
  %1460 = vmatpush.bf16.xpose.msra.mxu0 0
  %1461 = vmatpush.bf16.xpose.msra.mxu0 %v1434
  %1462 = vmatmul.bf16.gmra.mxu0 %v1452
  %v1463 = vpop.f32.mrf.mxu0
  %v1464 = vadd.f32 0.0, %v1463
  %v1465 = vpop.f32.mrf.mxu0
  %v1466 = vadd.f32 0.0, %v1465
  %1467 = vdwg.mxu0
  %v1468 = vmul.f32 %v1464, 0.17677669
  %v1469 = vmul.f32 %v1466, 0.17677669
  %v1470 = vxor.u32 %v1468, 2147483648
  %v1471 = vxor.u32 %v1469, 2147483648
  %v1472 = vmul.f32 %v1470, 1.442695
  %v1473 = vpow.pop %v1472
  %v1474 = vmul.f32 %v1471, 1.442695
  %v1475 = vpow.pop %v1474
  %v1476 = vadd.f32 %v1473, 1.0
  %v1477 = vadd.f32 %v1475, 1.0
  %v1478 = vrcp.pop %v1476
  %v1479 = vmul.f32 %v1476, %v1478
  %v1480 = vsub.f32 1.0, %v1479
  %v1481 = vmul.f32 %v1478, %v1480
  %v1482 = vadd.f32 %v1478, %v1481
  %vm1483 = vweird.f32 %v1476
  %vm1484 = vweird.f32 %v1478
  %vm1485 = vmor %vm1483, %vm1484
  %v1486 = vsel %vm1485, %v1478, %v1482
  %v1487 = vand.u32 2147483647, %v1476
  %vm1488 = vcmp.eq.f32.partialorder %v1487, 8.507059e+37
  %v1489 = vand.u32 %v1476, 2147483648
  %v1490 = vor.u32 1.1754944e-38, %v1489
  %v1491 = vsel %vm1488, %v1490, %v1486
  %v1492 = vmul.f32 1.0, %v1491
  %v1493 = vrcp.pop %v1477
  %v1494 = vmul.f32 %v1477, %v1493
  %v1495 = vsub.f32 1.0, %v1494
  %v1496 = vmul.f32 %v1493, %v1495
  %v1497 = vadd.f32 %v1493, %v1496
  %vm1498 = vweird.f32 %v1477
  %vm1499 = vweird.f32 %v1493
  %vm1500 = vmor %vm1498, %vm1499
  %v1501 = vsel %vm1500, %v1493, %v1497
  %v1502 = vand.u32 2147483647, %v1477
  %vm1503 = vcmp.eq.f32.partialorder %v1502, 8.507059e+37
  %v1504 = vand.u32 %v1477, 2147483648
  %v1505 = vor.u32 1.1754944e-38, %v1504
  %v1506 = vsel %vm1503, %v1505, %v1501
  %v1507 = vmul.f32 1.0, %v1506
  %v1508 = vsel %vm87, %v1492, -inf
  %v1509 = vsel %vm87, %v1507, -inf
  %v1510 = vmax.f32 %v1508, %v1509
  %v1511 = vrot.slane %v1510, 4
  %v1512 = vmax.f32 %v1510, %v1511
  %v1513 = vrot.slane %v1512, 2
  %v1514 = vmax.f32 %v1512, %v1513
  %v1515 = vrot.slane %v1514, 1
  %v1516 = vmax.f32 %v1514, %v1515
  %vm1517 = vcmp.ge.f32.partialorder %v1492, %v1516
  %vm1518 = vcmp.ge.f32.partialorder %v1507, %v1516
  %v1519 = vsel %vm1517, -1.0, %v1492
  %v1520 = vsel %vm1518, -1.0, %v1507
  %v1521 = vsel %vm87, %v1519, -inf
  %v1522 = vsel %vm87, %v1520, -inf
  %v1523 = vmax.f32 %v1521, %v1522
  %v1524 = vrot.slane %v1523, 4
  %v1525 = vmax.f32 %v1523, %v1524
  %v1526 = vrot.slane %v1525, 2
  %v1527 = vmax.f32 %v1525, %v1526
  %v1528 = vrot.slane %v1527, 1
  %v1529 = vmax.f32 %v1527, %v1528
  %vm1530 = vcmp.ge.f32.partialorder %v1519, %v1529
  %vm1531 = vcmp.ge.f32.partialorder %v1520, %v1529
  %v1532 = vsel %vm1530, -1.0, %v1519
  %v1533 = vsel %vm1531, -1.0, %v1520
  %v1534 = vsel %vm87, %v1532, -inf
  %v1535 = vsel %vm87, %v1533, -inf
  %v1536 = vmax.f32 %v1534, %v1535
  %v1537 = vrot.slane %v1536, 4
  %v1538 = vmax.f32 %v1536, %v1537
  %v1539 = vrot.slane %v1538, 2
  %v1540 = vmax.f32 %v1538, %v1539
  %v1541 = vrot.slane %v1540, 1
  %v1542 = vmax.f32 %v1540, %v1541
  %vm1543 = vcmp.ge.f32.partialorder %v1532, %v1542
  %vm1544 = vcmp.ge.f32.partialorder %v1533, %v1542
  %v1545 = vsel %vm1543, -1.0, %v1532
  %v1546 = vsel %vm1544, -1.0, %v1533
  %v1547 = vsel %vm87, %v1545, -inf
  %v1548 = vsel %vm87, %v1546, -inf
  %v1549 = vmax.f32 %v1547, %v1548
  %v1550 = vrot.slane %v1549, 4
  %v1551 = vmax.f32 %v1549, %v1550
  %v1552 = vrot.slane %v1551, 2
  %v1553 = vmax.f32 %v1551, %v1552
  %v1554 = vrot.slane %v1553, 1
  %v1555 = vmax.f32 %v1553, %v1554
  %vm1556 = vcmp.ge.f32.partialorder %v1492, %v1555
  %vm1557 = vcmp.ge.f32.partialorder %v1507, %v1555
  %v1558 = vsel %vm1556, %v1492, 0.0
  %v1559 = vsel %vm1557, %v1507, 0.0
  %v1560 = vmax.f32 %v665, %v1558
  %v1561 = vmax.f32 %v666, %v1559
  %v1562 = vpack.c.bf16 %v1560, %v1560
  %v1563 = vpack.c.bf16 %v1561, %v1561
  %1564 = vst.msk [vmem:[#allocation2 + $0x10] sm:$0xf] %vm51, %v1562
  %1565 = vst.msk [vmem:[#allocation2 + $0x14] sm:$0xf] %vm51, %v1563
  %v1566 = vld [vmem:[#allocation2] sm:$0xf]
  %v1567 = vld [vmem:[#allocation2 + $0x4] sm:$0xf]
  %v1568 = vld [vmem:[#allocation2 + $0x8] sm:$0xf]
  %v1569 = vld [vmem:[#allocation2 + $0xc] sm:$0xf]
  %v1570 = vld [vmem:[#allocation2 + $0x10] sm:$0xf]
  %v1571 = vld [vmem:[#allocation2 + $0x14] sm:$0xf]
  %v1578 = vunpack.c.l.b16 %v1566
  %v1579 = vunpack.c.l.b16 %v1567
  %v1580 = vunpack.c.l.b16 %v1568
  %v1581 = vunpack.c.l.b16 %v1569
  %v1582 = vunpack.c.l.b16 %v1570
  %v1583 = vunpack.c.l.b16 %v1571
  %v1584 = vpack.c.b16 %v1579, %v1578
  %v1585 = vpack.c.b16 %v1581, %v1580
  %v1586 = vpack.c.b16 %v1583, %v1582
  %v1588 = vsel %vm87, %v1584, 0
  %v1591 = vsel %vm87, %v1585, 0
  %v1594 = vsel %vm87, %v1586, 0
  %1596 = vmatpush.bf16.msra.mxu0 0
  %1597 = vmatpush.bf16.msra.mxu0 0
  %1598 = vmatpush.bf16.msra.mxu0 0
  %1599 = vmatpush.bf16.msra.mxu0 0
  %1600 = vmatpush.bf16.msra.mxu0 0
  %1601 = vmatpush.bf16.msra.mxu0 0
  %1602 = vmatpush.bf16.msra.mxu0 0
  %1603 = vmatpush.bf16.msra.mxu0 %v981
  %1604 = vmatmul.bf16.gmra.mxu0 %v1588
  %v1605 = vpop.f32.mrf.mxu0
  %v1606 = vadd.f32 0.0, %v1605
  %v1607 = vpop.f32.mrf.mxu0
  %v1608 = vadd.f32 0.0, %v1607
  %1609 = vmatmul.bf16.gmra.mxu0 %v1591
  %v1610 = vpop.f32.mrf.mxu0
  %v1611 = vadd.f32 0.0, %v1610
  %v1612 = vpop.f32.mrf.mxu0
  %v1613 = vadd.f32 0.0, %v1612
  %1614 = vmatmul.bf16.gmra.mxu0 %v1594
  %v1615 = vpop.f32.mrf.mxu0
  %v1616 = vadd.f32 0.0, %v1615
  %v1617 = vpop.f32.mrf.mxu0
  %v1618 = vadd.f32 0.0, %v1617
  %1619 = vdwg.mxu0
  %v1620 = vpack.c.bf16 %v1608, %v1606
  %v1621 = vld [vmem:[%s11] sm:$0xf]
  %v1622 = vld [vmem:[%s11 + $0x4] sm:$0xf]
  %v1623 = vld [vmem:[%s11 + $0x8] sm:$0xf]
  %v1624 = vld [vmem:[%s11 + $0xc] sm:$0xf]
  %v1625 = vpack.c.bf16 %v1613, %v1611
  %s1626 = scalar_lea.vmem %s11, 16
  %v1627 = vld [vmem:[%s1626] sm:$0xf]
  %v1628 = vld [vmem:[%s1626 + $0x4] sm:$0xf]
  %v1629 = vld [vmem:[%s1626 + $0x8] sm:$0xf]
  %v1630 = vld [vmem:[%s1626 + $0xc] sm:$0xf]
  %v1635 = vunpack.c.l.b16 %v1627
  %v1636 = vunpack.c.l.b16 %v1628
  %v1637 = vunpack.c.l.b16 %v1629
  %v1638 = vunpack.c.l.b16 %v1630
  %v1639 = vpack.c.b16 %v1636, %v1635
  %v1640 = vpack.c.b16 %v1638, %v1637
  %v1644 = vsel %vm60, %v1625, 0
  %1646 = vmatpush.bf16.msra.mxu0 0
  %1647 = vmatpush.bf16.msra.mxu0 0
  %1648 = vmatpush.bf16.msra.mxu0 0
  %1649 = vmatpush.bf16.msra.mxu0 0
  %1650 = vmatpush.bf16.msra.mxu0 0
  %1651 = vmatpush.bf16.msra.mxu0 0
  %1652 = vmatpush.bf16.msra.mxu0 %v1640
  %1653 = vmatpush.bf16.msra.mxu0 %v1639
  %1654 = vmatmul.bf16.gmra.mxu0 %v1644
  %v1655 = vpop.f32.mrf.mxu0
  %v1656 = vadd.f32 0.0, %v1655
  %v1657 = vpop.f32.mrf.mxu0
  %v1658 = vadd.f32 0.0, %v1657
  %1659 = vdwg.mxu0
  %v1664 = vunpack.c.l.b16 %v1621
  %v1665 = vunpack.c.l.b16 %v1622
  %v1666 = vunpack.c.l.b16 %v1623
  %v1667 = vunpack.c.l.b16 %v1624
  %v1668 = vpack.c.b16 %v1665, %v1664
  %v1669 = vpack.c.b16 %v1667, %v1666
  %v1673 = vsel %vm60, %v1620, 0
  %1675 = vmatpush.bf16.msra.mxu0 0
  %1676 = vmatpush.bf16.msra.mxu0 0
  %1677 = vmatpush.bf16.msra.mxu0 0
  %1678 = vmatpush.bf16.msra.mxu0 0
  %1679 = vmatpush.bf16.msra.mxu0 0
  %1680 = vmatpush.bf16.msra.mxu0 0
  %1681 = vmatpush.bf16.msra.mxu0 %v1669
  %1682 = vmatpush.bf16.msra.mxu0 %v1668
  %1683 = vmatmul.bf16.gmra.mxu0 %v1673
  %v1684 = vpop.f32.mrf.mxu0
  %v1685 = vadd.f32 %v1656, %v1684
  %v1686 = vpop.f32.mrf.mxu0
  %v1687 = vadd.f32 %v1658, %v1686
  %1688 = vdwg.mxu0
  %v1689 = vpack.c.bf16 %v1618, %v1616
  %s1690 = scalar_lea.vmem %s11, 32
  %v1691 = vld [vmem:[%s1690] sm:$0xf]
  %v1692 = vld [vmem:[%s1690 + $0x4] sm:$0xf]
  %v1693 = vld [vmem:[%s1690 + $0x8] sm:$0xf]
  %v1694 = vld [vmem:[%s1690 + $0xc] sm:$0xf]
  %v1699 = vunpack.c.l.b16 %v1691
  %v1700 = vunpack.c.l.b16 %v1692
  %v1701 = vunpack.c.l.b16 %v1693
  %v1702 = vunpack.c.l.b16 %v1694
  %v1703 = vpack.c.b16 %v1700, %v1699
  %v1704 = vpack.c.b16 %v1702, %v1701
  %v1708 = vsel %vm60, %v1689, 0
  %1710 = vmatpush.bf16.msra.mxu0 0
  %1711 = vmatpush.bf16.msra.mxu0 0
  %1712 = vmatpush.bf16.msra.mxu0 0
  %1713 = vmatpush.bf16.msra.mxu0 0
  %1714 = vmatpush.bf16.msra.mxu0 0
  %1715 = vmatpush.bf16.msra.mxu0 0
  %1716 = vmatpush.bf16.msra.mxu0 %v1704
  %1717 = vmatpush.bf16.msra.mxu0 %v1703
  %1718 = vmatmul.bf16.gmra.mxu0 %v1708
  %v1719 = vpop.f32.mrf.mxu0
  %v1720 = vadd.f32 0.0, %v1719
  %v1721 = vpop.f32.mrf.mxu0
  %v1722 = vadd.f32 0.0, %v1721
  %1723 = vdwg.mxu0
  %v1724 = vadd.f32 %v1685, %v1720
  %v1725 = vadd.f32 %v1687, %v1722
  %v1726 = vld [vmem:[%s12] sm:$0x1]
  %v1728 = vperm.slane %v1726, 0
  %v1730 = vadd.f32 %v1724, %v1728
  %v1731 = vadd.f32 %v1725, %v1728
  %v1732 = vmax.f32 %v1730, 0.0
  %v1733 = vmax.f32 %v1731, 0.0
  %1734 = vst.msk [vmem:[%s13] sm:$0xff] %vm60, %v1732
  %1735 = vst.msk [vmem:[%s13 + $0x8] sm:$0xff] %vm60, %v1733
  // Predicated region
  $region54: #{dgm_gearnet_edge_forward.1} parent=0 // pred_check
    _
  $region55: #{dgm_gearnet_edge_forward.1} parent=0 // pred_check_branch
    %1737 = sbr.rel (0) target = $region57
  $region56: #{dgm_gearnet_edge_forward.1} parent=0 // pred_region
    _
  $region57: #{dgm_gearnet_edge_forward.1} parent=0 // pred_fallthru
    _
  // Predicated region
  $region58: #{dgm_gearnet_edge_forward.1} parent=0 // pred_check
    _
  $region59: #{dgm_gearnet_edge_forward.1} parent=0 // pred_check_branch
    %1739 = sbr.rel (0) target = $region61
  $region60: #{dgm_gearnet_edge_forward.1} parent=0 // pred_region
    _
  $region61: #{dgm_gearnet_edge_forward.1} parent=0 // pred_fallthru
    _

</llo_original>
